<compile_context>
chip_gen: v5e
topology: v5e:2x2
jax: 0.10.0
libtpu: 0.0.40
codegen_flags: <defaults>
</compile_context>

<pallas_src>
import math
import functools

import jax
import jax.numpy as jnp
from jax.experimental import pallas as pl
from jax.experimental.pallas import tpu as pltpu


def _cdiv(a, b):
    return -(-a // b)


def _round_up(n, m):
    return _cdiv(n, m) * m


# ----------------------------------------------------------------------------- kernel

def _make_kernel(depth, modulated_layer_id, in_dim, use_pe, activation, compute_dtype):
    """Returns a kernel closed over the static hyper-parameters.

    Ref order:
      x, [pe_w],
      layer 0 (use_pe): in_dim cos blocks, in_dim sin blocks, bias
      layer 0 (no pe) : weight, bias
      layers 1..depth-1: weight, bias
      out
    All activations inside are channel-first (C, TN), TN on lanes.
    """

    def kernel(*refs):
        idx = 0
        x_ref = refs[idx]; idx += 1                    # (1, in_dim, TN)
        pe_w_ref = None
        if use_pe:
            pe_w_ref = refs[idx]; idx += 1             # (pe_half, 1), pi already folded

        layer_refs = []
        for i in range(depth):
            if i == 0 and use_pe:
                ws = list(refs[idx: idx + 2 * in_dim]); idx += 2 * in_dim
                bb = refs[idx]; idx += 1
                layer_refs.append((ws, bb))
            else:
                wt = refs[idx]; idx += 1
                bb = refs[idx]; idx += 1
                layer_refs.append((wt, bb))
        o_ref = refs[idx]                              # (1, out_dim, TN)

        def get(layer, ref):
            # The modulated layer's params carry a per-batch leading block dim of 1.
            return ref[0] if layer == modulated_layer_id else ref[...]

        x = x_ref[0]                                   # (in_dim, TN), f32

        if use_pe:
            pe_w = pe_w_ref[...]                       # (pe_half, 1) == pi * freqs
            ws, b_ref = layer_refs[0]
            bias0 = get(0, b_ref).astype(jnp.float32)  # (fan_out, 1)
            acc = None
            for i in range(in_dim):
                # Broadcasted outer product (pe_half,1)*(1,TN) -> (pe_half, TN).
                proj = pe_w * x[i:i + 1, :]
                c = jnp.cos(proj).astype(compute_dtype)
                s = jnp.sin(proj).astype(compute_dtype)
                wc = get(0, ws[i]).astype(compute_dtype)            # (fan_out, pe_half)
                wsin = get(0, ws[in_dim + i]).astype(compute_dtype)
                part = (jnp.dot(wc, c, preferred_element_type=jnp.float32)
                        + jnp.dot(wsin, s, preferred_element_type=jnp.float32))
                acc = part if acc is None else acc + part
            h = acc + bias0
            if depth > 1:
                h = jnp.maximum(h, 0.0)                # ReLU after layer 0
            start = 1
        else:
            h = x
            start = 0

        for i in range(start, depth):
            wt_ref, b_ref = layer_refs[i]
            wt = get(i, wt_ref).astype(compute_dtype)  # (fan_out, fan_in)
            bb = get(i, b_ref).astype(jnp.float32)     # (fan_out, 1)
            h = jnp.dot(wt, h.astype(compute_dtype),
                        preferred_element_type=jnp.float32) + bb
            if i < depth - 1:
                h = jnp.maximum(h, 0.0)

        # out_bias already folded into the last layer's bias column (wrapper).
        if activation == "sigmoid":
            h = jax.nn.sigmoid(h)
        elif activation == "tanh":
            h = jnp.tanh(h)

        o_ref[0] = h.astype(o_ref.dtype)               # lane-dense store

    return kernel


# ----------------------------------------------------------------------------- wrapper

def hypo_mlp_ipc_forward(
    x,                      # [B, *query_shape, in_dim]
    wbs,                    # list len `depth`; wbs[mod_id] is [B, d+1, c], others [d+1, c]
    *,
    modulated_layer_id,
    use_pe,
    pe_dim,
    pe_sigma,
    out_bias=0.0,
    activation=None,
    tile_n=2048,
    compute_dtype=jnp.float32,   # set jnp.bfloat16 for MXU-native matmuls (looser tol)
    out_dtype=None,              # e.g. jnp.bfloat16 on v5e to halve write-back bytes
):
    depth = len(wbs)
    B = x.shape[0]
    query_shape = x.shape[1:-1]
    in_dim = x.shape[-1]
    out_dim = wbs[-1].shape[-1]
    out_dtype = jnp.float32 if out_dtype is None else out_dtype
    if pe_dim % 2:
        pe_dim -= 1
    pe_half = pe_dim // 2

    # ---- channel-first input: (B, in_dim, N), N on lanes ----
    xf = x.reshape(B, -1, in_dim).astype(jnp.float32)
    n_pts = xf.shape[1]
    xcf = jnp.transpose(xf, (0, 2, 1))

    # Tile size: clamp to the (128-aligned) problem size so small N doesn't pad to a
    # full tile, and make sure a v7x megacore gets at least two grid steps.
    tile = max(128, _round_up(min(tile_n, _round_up(n_pts, 128)), 128))
    n_tiles = _cdiv(n_pts, tile)
    if B * n_tiles < 2 and n_pts > 128:
        tile = max(128, _round_up(_cdiv(n_pts, 2), 128))
        n_tiles = _cdiv(n_pts, tile)
    n_total = n_tiles * tile
    n_pad = n_total - n_pts
    if n_pad:
        xcf = jnp.pad(xcf, ((0, 0), (0, 0), (0, n_pad)))

    # PE frequency column with the pi factor folded in.
    pe_w = (math.pi * jnp.exp(jnp.linspace(0.0, math.log(pe_sigma), pe_half))
            ).astype(jnp.float32).reshape(pe_half, 1)

    in_specs = [pl.BlockSpec((1, in_dim, tile), lambda b, n: (b, 0, n))]
    inputs = [xcf]
    if use_pe:
        in_specs.append(pl.BlockSpec((pe_half, 1), lambda b, n: (0, 0)))
        inputs.append(pe_w)

    fan_ins, fan_outs = [], []
    for i, wb in enumerate(wbs):
        wb = wb.astype(jnp.float32)
        mod = (i == modulated_layer_id)
        fan_in = wb.shape[-2] - 1
        fan_out = wb.shape[-1]
        fan_ins.append(fan_in)
        fan_outs.append(fan_out)

        if mod:
            wt = jnp.transpose(wb[:, :-1, :], (0, 2, 1))      # (B, fan_out, fan_in)
            bb = jnp.transpose(wb[:, -1:, :], (0, 2, 1))      # (B, fan_out, 1)
        else:
            wt = wb[:-1, :].T                                 # (fan_out, fan_in)
            bb = wb[-1:, :].T                                 # (fan_out, 1)

        if i == depth - 1:
            bb = bb + float(out_bias)                          # fold out_bias

        if i == 0 and use_pe:
            # Split W0 columns into per-(trig, input-dim) blocks -> no in-kernel concat.
            for t in range(2):            # 0: cos block, 1: sin block
                for d in range(in_dim):
                    lo = t * in_dim * pe_half + d * pe_half
                    blk = wt[..., lo:lo + pe_half].astype(compute_dtype)
                    if mod:
                        in_specs.append(pl.BlockSpec((1,) + blk.shape[1:],
                                                     lambda b, n: (b, 0, 0)))
                    else:
                        in_specs.append(pl.BlockSpec(blk.shape, lambda b, n: (0, 0)))
                    inputs.append(blk)
            if mod:
                in_specs.append(pl.BlockSpec((1,) + bb.shape[1:], lambda b, n: (b, 0, 0)))
            else:
                in_specs.append(pl.BlockSpec(bb.shape, lambda b, n: (0, 0)))
            inputs.append(bb)
        else:
            wt = wt.astype(compute_dtype)
            if mod:
                in_specs.append(pl.BlockSpec((1,) + wt.shape[1:], lambda b, n: (b, 0, 0)))
                in_specs.append(pl.BlockSpec((1,) + bb.shape[1:], lambda b, n: (b, 0, 0)))
            else:
                in_specs.append(pl.BlockSpec(wt.shape, lambda b, n: (0, 0)))
                in_specs.append(pl.BlockSpec(bb.shape, lambda b, n: (0, 0)))
            inputs += [wt, bb]

    # ---- VMEM budget (double-buffered IO tiles + working activation copies), capped
    # at 64 MiB so the limit is valid on v7x as well as v5e/v6e.
    max_ch = max([2 * in_dim * pe_half if use_pe else in_dim] + fan_outs)
    io_tile_bytes = (in_dim + out_dim) * tile * 4
    act_bytes = (max_ch + (2 * pe_half if use_pe else 0)) * tile * 4
    vmem_limit = int(min(64 << 20, max(32 << 20, 3 * (2 * io_tile_bytes + 4 * act_bytes))))

    # ---- advisory cost estimate ----
    pe_in0 = 2 * in_dim * pe_half if use_pe else in_dim
    eff_fan_ins = [pe_in0] + fan_ins[1:]
    flops = 2 * B * n_total * sum(fi * fo for fi, fo in zip(eff_fan_ins, fan_outs))
    trans = B * n_total * (2 * in_dim * pe_half if use_pe else 0)
    if activation in ("sigmoid", "tanh"):
        trans += B * n_total * out_dim
    bytes_accessed = int(xcf.size * 4 + B * out_dim * n_total * jnp.dtype(out_dtype).itemsize
                         + sum(a.size * a.dtype.itemsize for a in inputs[1:]))

    kernel = _make_kernel(depth, modulated_layer_id, in_dim, use_pe, activation,
                          compute_dtype)

    out = pl.pallas_call(
        kernel,
        out_shape=jax.ShapeDtypeStruct((B, out_dim, n_total), out_dtype),
        grid=(B, n_tiles),
        in_specs=in_specs,
        out_specs=pl.BlockSpec((1, out_dim, tile), lambda b, n: (b, 0, n)),
        compiler_params=pltpu.CompilerParams(
            dimension_semantics=("parallel", "parallel"),
            vmem_limit_bytes=vmem_limit),
        cost_estimate=pl.CostEstimate(flops=int(flops), transcendentals=int(trans),
                                      bytes_accessed=bytes_accessed),
    )(*inputs)

    out = out[:, :, :n_pts]                                   # drop lane padding
    # TODO(synk): if the downstream consumer can take channel-first (B, out_dim, N),
    # drop this transpose (it is an extra HBM read+write on a memory-bound op).
    out = jnp.transpose(out, (0, 2, 1))
    return out.reshape(B, *query_shape, out_dim)


# ----------------------------------------------------------------------------- pure-JAX reference

def hypo_mlp_ipc_reference(x, wbs, *, modulated_layer_id, use_pe, pe_dim, pe_sigma,
                           out_bias=0.0, activation=None):
    B = x.shape[0]
    query_shape = x.shape[1:-1]
    in_dim = x.shape[-1]
    h = x.reshape(B, -1, in_dim).astype(jnp.float32)
    if use_pe:
        w = jnp.exp(jnp.linspace(0.0, math.log(pe_sigma), pe_dim // 2)).astype(jnp.float32)
        proj = (h[..., None] * w).reshape(B, h.shape[1], -1)
        h = jnp.concatenate([jnp.cos(math.pi * proj), jnp.sin(math.pi * proj)], axis=-1)
    for i, wb in enumerate(wbs):
        if i == modulated_layer_id:
            hw = jnp.einsum("bnd,bdc->bnc", h, wb[:, :-1, :]) + wb[:, -1:, :]
        else:
            hw = h @ wb[:-1, :] + wb[-1:, :]
        h = jax.nn.relu(hw) if i < len(wbs) - 1 else hw + out_bias
    if activation == "sigmoid":
        h = jax.nn.sigmoid(h)
    elif activation == "tanh":
        h = jnp.tanh(h)
    return h.reshape(B, *query_shape, -1)


# ----------------------------------------------------------------------------- demo

if __name__ == "__main__":
    B = 2
    H_SP, W_SP = 16, 16           # 256 query points per sample
    IN_DIM = 2
    PE_DIM = 8
    PE_SIGMA = 128.0
    DEPTH = 3
    HIDDEN = 32
    OUT_DIM = 3
    MOD_ID = 1
    OUT_BIAS = 0.5

    key = jax.random.PRNGKey(0)
    k_x, k0, k1, k2, k3, k4 = jax.random.split(key, 6)

    x = jax.random.uniform(k_x, (B, H_SP, W_SP, IN_DIM), dtype=jnp.float32)

    def init_wb(k, shape):
        fan_in = shape[-2] - 1
        bound = 1.0 / math.sqrt(fan_in)
        return jax.random.uniform(k, shape, jnp.float32, -bound, bound)

    d0 = IN_DIM * PE_DIM
    wb0 = init_wb(k0, (d0 + 1, HIDDEN))
    wb1 = init_wb(k1, (B, HIDDEN + 1, HIDDEN))       # modulated (per-sample) layer
    wb2 = init_wb(k2, (HIDDEN + 1, OUT_DIM))
    wbs = [wb0, wb1, wb2]

    common = dict(modulated_layer_id=MOD_ID, use_pe=True, pe_dim=PE_DIM,
                  pe_sigma=PE_SIGMA, out_bias=OUT_BIAS)

    # 1) f32 compute path (tight tolerance), with and without final activation.
    for activation in (None, "sigmoid"):
        run = functools.partial(hypo_mlp_ipc_forward, activation=activation,
                                tile_n=2048, compute_dtype=jnp.float32, **common)
        out = jax.block_until_ready(run(x, wbs))
        ref = hypo_mlp_ipc_reference(x, wbs, activation=activation, **common)
        assert out.shape == (B, H_SP, W_SP, OUT_DIM), out.shape
        assert jnp.allclose(out, ref, rtol=1e-3, atol=1e-3), \
            f"f32 max abs err = {float(jnp.max(jnp.abs(out - ref)))}"

    # 2) bf16 matmul path (MXU-native, f32 accumulate) -> looser tolerance.
    out_bf = jax.block_until_ready(
        hypo_mlp_ipc_forward(x, wbs, activation="sigmoid", tile_n=2048,
                             compute_dtype=jnp.bfloat16, **common))
    ref = hypo_mlp_ipc_reference(x, wbs, activation="sigmoid", **common)
    assert jnp.allclose(out_bf, ref, rtol=5e-2, atol=5e-2), \
        f"bf16 max abs err = {float(jnp.max(jnp.abs(out_bf - ref)))}"

    # 3) no-PE path with the modulated layer last (also exercises out_bias fold there).
    wb0b = init_wb(k3, (IN_DIM + 1, HIDDEN))
    wb1b = init_wb(k4, (B, HIDDEN + 1, OUT_DIM))
    wbs2 = [wb0b, wb1b]
    kw2 = dict(modulated_layer_id=1, use_pe=False, pe_dim=PE_DIM, pe_sigma=PE_SIGMA,
               out_bias=OUT_BIAS, activation="tanh")
    out2 = jax.block_until_ready(hypo_mlp_ipc_forward(x, wbs2, tile_n=2048, **kw2))
    ref2 = hypo_mlp_ipc_reference(x, wbs2, **kw2)
    assert jnp.allclose(out2, ref2, rtol=1e-3, atol=1e-3), \
        f"no-PE max abs err = {float(jnp.max(jnp.abs(out2 - ref2)))}"

    print("KERNEL_OK")
</pallas_src>

<mosaic_0001>
module attributes {stable_mosaic.version = 11 : i64} {
  func.func @kernel(%arg0: i32, %arg1: i32, %arg2: memref<1x2x256xf32, #tpu.memory_space<vmem>>, %arg3: memref<4x1xf32, #tpu.memory_space<vmem>>, %arg4: memref<32x4xf32, #tpu.memory_space<vmem>>, %arg5: memref<32x4xf32, #tpu.memory_space<vmem>>, %arg6: memref<32x4xf32, #tpu.memory_space<vmem>>, %arg7: memref<32x4xf32, #tpu.memory_space<vmem>>, %arg8: memref<32x1xf32, #tpu.memory_space<vmem>>, %arg9: memref<1x32x32xf32, #tpu.memory_space<vmem>>, %arg10: memref<1x32x1xf32, #tpu.memory_space<vmem>>, %arg11: memref<3x32xf32, #tpu.memory_space<vmem>>, %arg12: memref<3x1xf32, #tpu.memory_space<vmem>>, %arg13: memref<1x3x256xf32, #tpu.memory_space<vmem>>) attributes {dimension_semantics = [#tpu.dimension_semantics<parallel>, #tpu.dimension_semantics<parallel>], iteration_bounds = array<i64: 2, 1>, scalar_prefetch = 0 : i64, scratch_operands = 0 : i64, tpu.core_type = #tpu.core_type<tc>, window_params = [{transform_indices = @transform_0, window_bounds = array<i64: 1, 2, 256>}, {pipeline_mode = #tpu.pipeline_mode<synchronous>, transform_indices = @transform_1, window_bounds = array<i64: 4, 1>}, {pipeline_mode = #tpu.pipeline_mode<synchronous>, transform_indices = @transform_2, window_bounds = array<i64: 32, 4>}, {pipeline_mode = #tpu.pipeline_mode<synchronous>, transform_indices = @transform_3, window_bounds = array<i64: 32, 4>}, {pipeline_mode = #tpu.pipeline_mode<synchronous>, transform_indices = @transform_4, window_bounds = array<i64: 32, 4>}, {pipeline_mode = #tpu.pipeline_mode<synchronous>, transform_indices = @transform_5, window_bounds = array<i64: 32, 4>}, {pipeline_mode = #tpu.pipeline_mode<synchronous>, transform_indices = @transform_6, window_bounds = array<i64: 32, 1>}, {transform_indices = @transform_7, window_bounds = array<i64: 1, 32, 32>}, {transform_indices = @transform_8, window_bounds = array<i64: 1, 32, 1>}, {pipeline_mode = #tpu.pipeline_mode<synchronous>, transform_indices = @transform_9, window_bounds = array<i64: 3, 32>}, {pipeline_mode = #tpu.pipeline_mode<synchronous>, transform_indices = @transform_10, window_bounds = array<i64: 3, 1>}, {transform_indices = @transform_11, window_bounds = array<i64: 1, 3, 256>}]} {
    %c0 = arith.constant 0 : index
    %c0_0 = arith.constant 0 : index
    %c0_1 = arith.constant 0 : index
    %0 = vector.load %arg2[%c0, %c0_0, %c0_1] : memref<1x2x256xf32, #tpu.memory_space<vmem>>, vector<1x2x256xf32>
    %1 = vector.shape_cast %0 : vector<1x2x256xf32> to vector<2x256xf32>
    %c0_2 = arith.constant 0 : index
    %c0_3 = arith.constant 0 : index
    %2 = vector.load %arg3[%c0_2, %c0_3] : memref<4x1xf32, #tpu.memory_space<vmem>>, vector<4x1xf32>
    %c0_4 = arith.constant 0 : index
    %c0_5 = arith.constant 0 : index
    %3 = vector.load %arg8[%c0_4, %c0_5] : memref<32x1xf32, #tpu.memory_space<vmem>>, vector<32x1xf32>
    %4 = vector.extract_strided_slice %1 {offsets = [0, 0], sizes = [1, 256], strides = [1, 1]} : vector<2x256xf32> to vector<1x256xf32>
    %5 = vector.broadcast %2 : vector<4x1xf32> to vector<4x256xf32>
    %6 = vector.broadcast %4 : vector<1x256xf32> to vector<4x256xf32>
    %7 = arith.mulf %5, %6 : vector<4x256xf32>
    %8 = math.cos %7 : vector<4x256xf32>
    %9 = math.sin %7 : vector<4x256xf32>
    %c0_6 = arith.constant 0 : index
    %c0_7 = arith.constant 0 : index
    %10 = vector.load %arg4[%c0_6, %c0_7] : memref<32x4xf32, #tpu.memory_space<vmem>>, vector<32x4xf32>
    %c0_8 = arith.constant 0 : index
    %c0_9 = arith.constant 0 : index
    %11 = vector.load %arg6[%c0_8, %c0_9] : memref<32x4xf32, #tpu.memory_space<vmem>>, vector<32x4xf32>
    %cst = arith.constant dense<0.000000e+00> : vector<32x256xf32>
    %12 = tpu.matmul %10, %8, %cst {dimension_numbers = #tpu.dot_dimension_numbers<[1], [0], [0], [1], [0, 0, 1, 1], [], []>} : vector<32x4xf32>, vector<4x256xf32>, vector<32x256xf32> -> vector<32x256xf32>
    %cst_10 = arith.constant dense<0.000000e+00> : vector<32x256xf32>
    %13 = tpu.matmul %11, %9, %cst_10 {dimension_numbers = #tpu.dot_dimension_numbers<[1], [0], [0], [1], [0, 0, 1, 1], [], []>} : vector<32x4xf32>, vector<4x256xf32>, vector<32x256xf32> -> vector<32x256xf32>
    %14 = arith.addf %12, %13 : vector<32x256xf32>
    %15 = vector.extract_strided_slice %1 {offsets = [1, 0], sizes = [1, 256], strides = [1, 1]} : vector<2x256xf32> to vector<1x256xf32>
    %16 = vector.broadcast %2 : vector<4x1xf32> to vector<4x256xf32>
    %17 = vector.broadcast %15 : vector<1x256xf32> to vector<4x256xf32>
    %18 = arith.mulf %16, %17 : vector<4x256xf32>
    %19 = math.cos %18 : vector<4x256xf32>
    %20 = math.sin %18 : vector<4x256xf32>
    %c0_11 = arith.constant 0 : index
    %c0_12 = arith.constant 0 : index
    %21 = vector.load %arg5[%c0_11, %c0_12] : memref<32x4xf32, #tpu.memory_space<vmem>>, vector<32x4xf32>
    %c0_13 = arith.constant 0 : index
    %c0_14 = arith.constant 0 : index
    %22 = vector.load %arg7[%c0_13, %c0_14] : memref<32x4xf32, #tpu.memory_space<vmem>>, vector<32x4xf32>
    %cst_15 = arith.constant dense<0.000000e+00> : vector<32x256xf32>
    %23 = tpu.matmul %21, %19, %cst_15 {dimension_numbers = #tpu.dot_dimension_numbers<[1], [0], [0], [1], [0, 0, 1, 1], [], []>} : vector<32x4xf32>, vector<4x256xf32>, vector<32x256xf32> -> vector<32x256xf32>
    %cst_16 = arith.constant dense<0.000000e+00> : vector<32x256xf32>
    %24 = tpu.matmul %22, %20, %cst_16 {dimension_numbers = #tpu.dot_dimension_numbers<[1], [0], [0], [1], [0, 0, 1, 1], [], []>} : vector<32x4xf32>, vector<4x256xf32>, vector<32x256xf32> -> vector<32x256xf32>
    %25 = arith.addf %23, %24 : vector<32x256xf32>
    %26 = arith.addf %14, %25 : vector<32x256xf32>
    %27 = vector.broadcast %3 : vector<32x1xf32> to vector<32x256xf32>
    %28 = arith.addf %26, %27 : vector<32x256xf32>
    %cst_17 = arith.constant 0.000000e+00 : f32
    %29 = vector.broadcast %cst_17 : f32 to vector<32x256xf32>
    %30 = arith.maximumf %28, %29 : vector<32x256xf32>
    %c0_18 = arith.constant 0 : index
    %c0_19 = arith.constant 0 : index
    %c0_20 = arith.constant 0 : index
    %31 = vector.load %arg9[%c0_18, %c0_19, %c0_20] : memref<1x32x32xf32, #tpu.memory_space<vmem>>, vector<1x32x32xf32>
    %32 = vector.shape_cast %31 : vector<1x32x32xf32> to vector<32x32xf32>
    %c0_21 = arith.constant 0 : index
    %c0_22 = arith.constant 0 : index
    %c0_23 = arith.constant 0 : index
    %33 = vector.load %arg10[%c0_21, %c0_22, %c0_23] : memref<1x32x1xf32, #tpu.memory_space<vmem>>, vector<1x32x1xf32>
    %34 = vector.shape_cast %33 : vector<1x32x1xf32> to vector<32x1xf32>
    %cst_24 = arith.constant dense<0.000000e+00> : vector<32x256xf32>
    %35 = tpu.matmul %32, %30, %cst_24 {dimension_numbers = #tpu.dot_dimension_numbers<[1], [0], [0], [1], [0, 0, 1, 1], [], []>} : vector<32x32xf32>, vector<32x256xf32>, vector<32x256xf32> -> vector<32x256xf32>
    %36 = vector.broadcast %34 : vector<32x1xf32> to vector<32x256xf32>
    %37 = arith.addf %35, %36 : vector<32x256xf32>
    %cst_25 = arith.constant 0.000000e+00 : f32
    %38 = vector.broadcast %cst_25 : f32 to vector<32x256xf32>
    %39 = arith.maximumf %37, %38 : vector<32x256xf32>
    %c0_26 = arith.constant 0 : index
    %c0_27 = arith.constant 0 : index
    %40 = vector.load %arg11[%c0_26, %c0_27] : memref<3x32xf32, #tpu.memory_space<vmem>>, vector<3x32xf32>
    %c0_28 = arith.constant 0 : index
    %c0_29 = arith.constant 0 : index
    %41 = vector.load %arg12[%c0_28, %c0_29] : memref<3x1xf32, #tpu.memory_space<vmem>>, vector<3x1xf32>
    %cst_30 = arith.constant dense<0.000000e+00> : vector<3x256xf32>
    %42 = tpu.matmul %40, %39, %cst_30 {dimension_numbers = #tpu.dot_dimension_numbers<[1], [0], [0], [1], [0, 0, 1, 1], [], []>} : vector<3x32xf32>, vector<32x256xf32>, vector<3x256xf32> -> vector<3x256xf32>
    %43 = vector.broadcast %41 : vector<3x1xf32> to vector<3x256xf32>
    %44 = arith.addf %42, %43 : vector<3x256xf32>
    %c0_31 = arith.constant 0 : index
    %c0_32 = arith.constant 0 : index
    %c0_33 = arith.constant 0 : index
    %45 = vector.load %arg13[%c0_31, %c0_32, %c0_33] : memref<1x3x256xf32, #tpu.memory_space<vmem>>, vector<1x3x256xf32>
    %46 = vector.shape_cast %45 : vector<1x3x256xf32> to vector<3x256xf32>
    %47 = vector.shape_cast %44 : vector<3x256xf32> to vector<1x3x256xf32>
    tpu.vector_store %arg13[%c0_31, %c0_32, %c0_33], %47 {strides = array<i32>} : memref<1x3x256xf32, #tpu.memory_space<vmem>>, vector<1x3x256xf32>,
    return
  }
  func.func @transform_0(%arg0: i32, %arg1: i32) -> (i32, i32, i32) {
    %c0_i32 = arith.constant 0 : i32
    %c0_i32_0 = arith.constant 0 : i32
    return %arg0, %c0_i32, %arg1 : i32, i32, i32
  }
  func.func @transform_1(%arg0: i32, %arg1: i32) -> (i32, i32) {
    %c0_i32 = arith.constant 0 : i32
    %c0_i32_0 = arith.constant 0 : i32
    %c0_i32_1 = arith.constant 0 : i32
    return %c0_i32, %c0_i32_0 : i32, i32
  }
  func.func @transform_2(%arg0: i32, %arg1: i32) -> (i32, i32) {
    %c0_i32 = arith.constant 0 : i32
    %c0_i32_0 = arith.constant 0 : i32
    %c0_i32_1 = arith.constant 0 : i32
    return %c0_i32, %c0_i32_0 : i32, i32
  }
  func.func @transform_3(%arg0: i32, %arg1: i32) -> (i32, i32) {
    %c0_i32 = arith.constant 0 : i32
    %c0_i32_0 = arith.constant 0 : i32
    %c0_i32_1 = arith.constant 0 : i32
    return %c0_i32, %c0_i32_0 : i32, i32
  }
  func.func @transform_4(%arg0: i32, %arg1: i32) -> (i32, i32) {
    %c0_i32 = arith.constant 0 : i32
    %c0_i32_0 = arith.constant 0 : i32
    %c0_i32_1 = arith.constant 0 : i32
    return %c0_i32, %c0_i32_0 : i32, i32
  }
  func.func @transform_5(%arg0: i32, %arg1: i32) -> (i32, i32) {
    %c0_i32 = arith.constant 0 : i32
    %c0_i32_0 = arith.constant 0 : i32
    %c0_i32_1 = arith.constant 0 : i32
    return %c0_i32, %c0_i32_0 : i32, i32
  }
  func.func @transform_6(%arg0: i32, %arg1: i32) -> (i32, i32) {
    %c0_i32 = arith.constant 0 : i32
    %c0_i32_0 = arith.constant 0 : i32
    %c0_i32_1 = arith.constant 0 : i32
    return %c0_i32, %c0_i32_0 : i32, i32
  }
  func.func @transform_7(%arg0: i32, %arg1: i32) -> (i32, i32, i32) {
    %c0_i32 = arith.constant 0 : i32
    %c0_i32_0 = arith.constant 0 : i32
    %c0_i32_1 = arith.constant 0 : i32
    return %arg0, %c0_i32, %c0_i32_0 : i32, i32, i32
  }
  func.func @transform_8(%arg0: i32, %arg1: i32) -> (i32, i32, i32) {
    %c0_i32 = arith.constant 0 : i32
    %c0_i32_0 = arith.constant 0 : i32
    %c0_i32_1 = arith.constant 0 : i32
    return %arg0, %c0_i32, %c0_i32_0 : i32, i32, i32
  }
  func.func @transform_9(%arg0: i32, %arg1: i32) -> (i32, i32) {
    %c0_i32 = arith.constant 0 : i32
    %c0_i32_0 = arith.constant 0 : i32
    %c0_i32_1 = arith.constant 0 : i32
    return %c0_i32, %c0_i32_0 : i32, i32
  }
  func.func @transform_10(%arg0: i32, %arg1: i32) -> (i32, i32) {
    %c0_i32 = arith.constant 0 : i32
    %c0_i32_0 = arith.constant 0 : i32
    %c0_i32_1 = arith.constant 0 : i32
    return %c0_i32, %c0_i32_0 : i32, i32
  }
  func.func @transform_11(%arg0: i32, %arg1: i32) -> (i32, i32, i32) {
    %c0_i32 = arith.constant 0 : i32
    %c0_i32_0 = arith.constant 0 : i32
    return %arg0, %c0_i32, %arg1 : i32, i32, i32
  }
}

</mosaic_0001>

<llo_original>
// kernel: tpu_custom_call.1
$region0: #{tpu_custom_call.1}
  #allocation0 [shape = 'u32[]', space=smem, size = 0x4, offset = 0x4, fixed_abs, tag = 'smem constant byte address 0x4 - core index']
  #allocation1 [shape = 'u32[72,128]{1,0:T(1,128)}', space=vmem, size = 0x9000, scoped, tag = 'internal scratch']
  %s0 = inlined_call_operand.vmem [shape: f32[2,2,256], index: 0, kind: input, shape index: {}]
  %s1 = inlined_call_operand.vmem [shape: f32[4,1], index: 1, kind: input, shape index: {}]
  %s2 = inlined_call_operand.vmem [shape: f32[32,4], index: 2, kind: input, shape index: {}]
  %s3 = inlined_call_operand.vmem [shape: f32[32,4], index: 3, kind: input, shape index: {}]
  %s4 = inlined_call_operand.vmem [shape: f32[32,4], index: 4, kind: input, shape index: {}]
  %s5 = inlined_call_operand.vmem [shape: f32[32,4], index: 5, kind: input, shape index: {}]
  %s6 = inlined_call_operand.vmem [shape: f32[32,1], index: 6, kind: input, shape index: {}]
  %s7 = inlined_call_operand.vmem [shape: f32[2,32,32], index: 7, kind: input, shape index: {}]
  %s8 = inlined_call_operand.vmem [shape: f32[2,32,1], index: 8, kind: input, shape index: {}]
  %s9 = inlined_call_operand.vmem [shape: f32[3,32], index: 9, kind: input, shape index: {}]
  %s10 = inlined_call_operand.vmem [shape: f32[3,1], index: 10, kind: input, shape index: {}]
  %s11 = inlined_call_operand.vmem [shape: f32[2,3,256], index: 11, kind: output, shape index: {}]
  %s12 = sld [smem:[#allocation0]]
  $region77: #{tpu_custom_call.1} parent=0
    _
  %s14 = ssub.s32 1, %s12
  %s15 = scalar_select 0, %s14, %s12
  loop: start=0, step=1, limit=4
  $region2: #{tpu_custom_call.1} parent=0 // loop_pre_header
    _
  $region3: #{tpu_custom_call.1} parent=0 // loop_header
    %s17 = sphi 0, %s21
    %p18 = scmp.ge.s32.totalorder %s17, 4
    %s24 = sphi 0, %s36
    %s25 = sphi 0, %s32
    %s26 = sphi 0, %s24
    %s27 = sphi 0, %s25
    %s28 = sphi 0, %s26
    %s29 = sphi 0, %s27
    %s41 = sphi 0, %s43
    %s44 = sphi 0, %s41
    %s45 = sphi 0, %s44
    %s61 = sphi 0, %s45
    %s65 = sphi 0, %s65
    %s67 = sphi 0, %s65
    %s68 = sphi 0, %s67
    %s82 = sphi 0, %s68
    %s86 = sphi 0, %s86
    %s88 = sphi 0, %s86
    %s89 = sphi 0, %s88
    %s103 = sphi 0, %s89
    %s107 = sphi 0, %s107
    %s109 = sphi 0, %s107
    %s110 = sphi 0, %s109
    %s124 = sphi 0, %s110
    %s128 = sphi 0, %s128
    %s130 = sphi 0, %s128
    %s131 = sphi 0, %s130
    %s145 = sphi 0, %s131
    %s149 = sphi 0, %s149
    %s151 = sphi 0, %s149
    %s152 = sphi 0, %s151
    %s166 = sphi 0, %s152
    %s170 = sphi 0, %s170
    %s172 = sphi 0, %s170
    %s173 = sphi 0, %s172
    %s187 = sphi 0, %s173
    %s193 = sphi 0, %s195
    %s196 = sphi 0, %s193
    %s197 = sphi 0, %s196
    %s213 = sphi 0, %s197
    %s219 = sphi 0, %s221
    %s222 = sphi 0, %s219
    %s223 = sphi 0, %s222
    %s239 = sphi 0, %s223
    %s243 = sphi 0, %s243
    %s245 = sphi 0, %s243
    %s246 = sphi 0, %s245
    %s260 = sphi 0, %s246
    %s264 = sphi 0, %s264
    %s266 = sphi 0, %s264
    %s267 = sphi 0, %s266
    %s281 = sphi 0, %s267
    %s289 = sphi 0, %s291
    %s292 = sphi 0, %s289
    %s293 = sphi 0, %s292
    %s309 = sphi 0, %s293
  $region4: #{tpu_custom_call.1} parent=0 // loop_header_branch
    %20 = sbr.rel (%p18) target = $region8
  $region5: #{tpu_custom_call.1} parent=0 // loop_body
    %s22 = ssub.s32 %s17, 1
    %s23 = ssub.s32 %s17, 2
    %s30 = sadd.s32 1, %s25
    %p31 = scmp.ge.s32.totalorder %s30, 1
    %s32 = scalar_select %p31, 0, %s30
    %s33 = sadd.s32 1, %s24
    %s34 = scalar_select %p31, %s33, %s24
    %p35 = scmp.ge.s32.totalorder %s34, 2
    %s36 = scalar_select %p35, 0, %s34
    %s37 = ssub.s32 %s24, %s36
    %s38 = ssub.s32 %s25, %s32
    %s39 = sor.u32 %s37, %s38
    %p40 = scmp.eq.s32.totalorder %s39, 0
    %s42 = sadd.s32 %s41, 1
    %s43 = scalar_select %p40, %s41, %s42
    %p46 = pneg %p40
    %p47 = scmp.eq.s32.totalorder %s17, 1
    %p48 = por %p46, %p47
    %p49 = scmp.ne.s32.totalorder %s41, %s44
    %p50 = scmp.eq.s32.totalorder %s17, 0
    %p51 = por %p49, %p50
    %p52 = scmp.ne.s32.totalorder %s41, %s44
    %p53 = scmp.eq.s32.totalorder %s22, 1
    %p54 = por %p52, %p53
    %p55 = scmp.ne.s32.totalorder %s44, %s45
    %p56 = scmp.eq.s32.totalorder %s22, 0
    %p57 = por %p55, %p56
    %p58 = scmp.ne.s32.totalorder %s44, %s45
    %p59 = scmp.eq.s32.totalorder %s23, 1
    %p60 = por %p58, %p59
    %p62 = scmp.ne.s32.totalorder %s45, %s61
    %p63 = scmp.eq.s32.totalorder %s23, 0
    %p64 = por %p62, %p63
    %s66 = sadd.s32 %s65, 1
    %p69 = scmp.eq.s32.totalorder %s17, 1
    %p70 = scmp.ne.s32.totalorder %s65, %s67
    %p71 = scmp.eq.s32.totalorder %s17, 0
    %p72 = por %p70, %p71
    %p73 = scmp.ne.s32.totalorder %s65, %s67
    %p74 = scmp.eq.s32.totalorder %s22, 1
    %p75 = por %p73, %p74
    %p76 = scmp.ne.s32.totalorder %s67, %s68
    %p77 = scmp.eq.s32.totalorder %s22, 0
    %p78 = por %p76, %p77
    %p79 = scmp.ne.s32.totalorder %s67, %s68
    %p80 = scmp.eq.s32.totalorder %s23, 1
    %p81 = por %p79, %p80
    %p83 = scmp.ne.s32.totalorder %s68, %s82
    %p84 = scmp.eq.s32.totalorder %s23, 0
    %p85 = por %p83, %p84
    %s87 = sadd.s32 %s86, 1
    %p90 = scmp.eq.s32.totalorder %s17, 1
    %p91 = scmp.ne.s32.totalorder %s86, %s88
    %p92 = scmp.eq.s32.totalorder %s17, 0
    %p93 = por %p91, %p92
    %p94 = scmp.ne.s32.totalorder %s86, %s88
    %p95 = scmp.eq.s32.totalorder %s22, 1
    %p96 = por %p94, %p95
    %p97 = scmp.ne.s32.totalorder %s88, %s89
    %p98 = scmp.eq.s32.totalorder %s22, 0
    %p99 = por %p97, %p98
    %p100 = scmp.ne.s32.totalorder %s88, %s89
    %p101 = scmp.eq.s32.totalorder %s23, 1
    %p102 = por %p100, %p101
    %p104 = scmp.ne.s32.totalorder %s89, %s103
    %p105 = scmp.eq.s32.totalorder %s23, 0
    %p106 = por %p104, %p105
    %s108 = sadd.s32 %s107, 1
    %p111 = scmp.eq.s32.totalorder %s17, 1
    %p112 = scmp.ne.s32.totalorder %s107, %s109
    %p113 = scmp.eq.s32.totalorder %s17, 0
    %p114 = por %p112, %p113
    %p115 = scmp.ne.s32.totalorder %s107, %s109
    %p116 = scmp.eq.s32.totalorder %s22, 1
    %p117 = por %p115, %p116
    %p118 = scmp.ne.s32.totalorder %s109, %s110
    %p119 = scmp.eq.s32.totalorder %s22, 0
    %p120 = por %p118, %p119
    %p121 = scmp.ne.s32.totalorder %s109, %s110
    %p122 = scmp.eq.s32.totalorder %s23, 1
    %p123 = por %p121, %p122
    %p125 = scmp.ne.s32.totalorder %s110, %s124
    %p126 = scmp.eq.s32.totalorder %s23, 0
    %p127 = por %p125, %p126
    %s129 = sadd.s32 %s128, 1
    %p132 = scmp.eq.s32.totalorder %s17, 1
    %p133 = scmp.ne.s32.totalorder %s128, %s130
    %p134 = scmp.eq.s32.totalorder %s17, 0
    %p135 = por %p133, %p134
    %p136 = scmp.ne.s32.totalorder %s128, %s130
    %p137 = scmp.eq.s32.totalorder %s22, 1
    %p138 = por %p136, %p137
    %p139 = scmp.ne.s32.totalorder %s130, %s131
    %p140 = scmp.eq.s32.totalorder %s22, 0
    %p141 = por %p139, %p140
    %p142 = scmp.ne.s32.totalorder %s130, %s131
    %p143 = scmp.eq.s32.totalorder %s23, 1
    %p144 = por %p142, %p143
    %p146 = scmp.ne.s32.totalorder %s131, %s145
    %p147 = scmp.eq.s32.totalorder %s23, 0
    %p148 = por %p146, %p147
    %s150 = sadd.s32 %s149, 1
    %p153 = scmp.eq.s32.totalorder %s17, 1
    %p154 = scmp.ne.s32.totalorder %s149, %s151
    %p155 = scmp.eq.s32.totalorder %s17, 0
    %p156 = por %p154, %p155
    %p157 = scmp.ne.s32.totalorder %s149, %s151
    %p158 = scmp.eq.s32.totalorder %s22, 1
    %p159 = por %p157, %p158
    %p160 = scmp.ne.s32.totalorder %s151, %s152
    %p161 = scmp.eq.s32.totalorder %s22, 0
    %p162 = por %p160, %p161
    %p163 = scmp.ne.s32.totalorder %s151, %s152
    %p164 = scmp.eq.s32.totalorder %s23, 1
    %p165 = por %p163, %p164
    %p167 = scmp.ne.s32.totalorder %s152, %s166
    %p168 = scmp.eq.s32.totalorder %s23, 0
    %p169 = por %p167, %p168
    %s171 = sadd.s32 %s170, 1
    %p174 = scmp.eq.s32.totalorder %s17, 1
    %p175 = scmp.ne.s32.totalorder %s170, %s172
    %p176 = scmp.eq.s32.totalorder %s17, 0
    %p177 = por %p175, %p176
    %p178 = scmp.ne.s32.totalorder %s170, %s172
    %p179 = scmp.eq.s32.totalorder %s22, 1
    %p180 = por %p178, %p179
    %p181 = scmp.ne.s32.totalorder %s172, %s173
    %p182 = scmp.eq.s32.totalorder %s22, 0
    %p183 = por %p181, %p182
    %p184 = scmp.ne.s32.totalorder %s172, %s173
    %p185 = scmp.eq.s32.totalorder %s23, 1
    %p186 = por %p184, %p185
    %p188 = scmp.ne.s32.totalorder %s173, %s187
    %p189 = scmp.eq.s32.totalorder %s23, 0
    %p190 = por %p188, %p189
    %s191 = ssub.s32 %s24, %s36
    %p192 = scmp.eq.s32.totalorder %s191, 0
    %s194 = sadd.s32 %s193, 1
    %s195 = scalar_select %p192, %s193, %s194
    %p198 = pneg %p192
    %p199 = scmp.eq.s32.totalorder %s17, 1
    %p200 = por %p198, %p199
    %p201 = scmp.ne.s32.totalorder %s193, %s196
    %p202 = scmp.eq.s32.totalorder %s17, 0
    %p203 = por %p201, %p202
    %p204 = scmp.ne.s32.totalorder %s193, %s196
    %p205 = scmp.eq.s32.totalorder %s22, 1
    %p206 = por %p204, %p205
    %p207 = scmp.ne.s32.totalorder %s196, %s197
    %p208 = scmp.eq.s32.totalorder %s22, 0
    %p209 = por %p207, %p208
    %p210 = scmp.ne.s32.totalorder %s196, %s197
    %p211 = scmp.eq.s32.totalorder %s23, 1
    %p212 = por %p210, %p211
    %p214 = scmp.ne.s32.totalorder %s197, %s213
    %p215 = scmp.eq.s32.totalorder %s23, 0
    %p216 = por %p214, %p215
    %s217 = ssub.s32 %s24, %s36
    %p218 = scmp.eq.s32.totalorder %s217, 0
    %s220 = sadd.s32 %s219, 1
    %s221 = scalar_select %p218, %s219, %s220
    %p224 = pneg %p218
    %p225 = scmp.eq.s32.totalorder %s17, 1
    %p226 = por %p224, %p225
    %p227 = scmp.ne.s32.totalorder %s219, %s222
    %p228 = scmp.eq.s32.totalorder %s17, 0
    %p229 = por %p227, %p228
    %p230 = scmp.ne.s32.totalorder %s219, %s222
    %p231 = scmp.eq.s32.totalorder %s22, 1
    %p232 = por %p230, %p231
    %p233 = scmp.ne.s32.totalorder %s222, %s223
    %p234 = scmp.eq.s32.totalorder %s22, 0
    %p235 = por %p233, %p234
    %p236 = scmp.ne.s32.totalorder %s222, %s223
    %p237 = scmp.eq.s32.totalorder %s23, 1
    %p238 = por %p236, %p237
    %p240 = scmp.ne.s32.totalorder %s223, %s239
    %p241 = scmp.eq.s32.totalorder %s23, 0
    %p242 = por %p240, %p241
    %s244 = sadd.s32 %s243, 1
    %p247 = scmp.eq.s32.totalorder %s17, 1
    %p248 = scmp.ne.s32.totalorder %s243, %s245
    %p249 = scmp.eq.s32.totalorder %s17, 0
    %p250 = por %p248, %p249
    %p251 = scmp.ne.s32.totalorder %s243, %s245
    %p252 = scmp.eq.s32.totalorder %s22, 1
    %p253 = por %p251, %p252
    %p254 = scmp.ne.s32.totalorder %s245, %s246
    %p255 = scmp.eq.s32.totalorder %s22, 0
    %p256 = por %p254, %p255
    %p257 = scmp.ne.s32.totalorder %s245, %s246
    %p258 = scmp.eq.s32.totalorder %s23, 1
    %p259 = por %p257, %p258
    %p261 = scmp.ne.s32.totalorder %s246, %s260
    %p262 = scmp.eq.s32.totalorder %s23, 0
    %p263 = por %p261, %p262
    %s265 = sadd.s32 %s264, 1
    %p268 = scmp.eq.s32.totalorder %s17, 1
    %p269 = scmp.ne.s32.totalorder %s264, %s266
    %p270 = scmp.eq.s32.totalorder %s17, 0
    %p271 = por %p269, %p270
    %p272 = scmp.ne.s32.totalorder %s264, %s266
    %p273 = scmp.eq.s32.totalorder %s22, 1
    %p274 = por %p272, %p273
    %p275 = scmp.ne.s32.totalorder %s266, %s267
    %p276 = scmp.eq.s32.totalorder %s22, 0
    %p277 = por %p275, %p276
    %p278 = scmp.ne.s32.totalorder %s266, %s267
    %p279 = scmp.eq.s32.totalorder %s23, 1
    %p280 = por %p278, %p279
    %p282 = scmp.ne.s32.totalorder %s267, %s281
    %p283 = scmp.eq.s32.totalorder %s23, 0
    %p284 = por %p282, %p283
    %s285 = ssub.s32 %s24, %s36
    %s286 = ssub.s32 %s25, %s32
    %s287 = sor.u32 %s285, %s286
    %p288 = scmp.eq.s32.totalorder %s287, 0
    %s290 = sadd.s32 %s289, 1
    %s291 = scalar_select %p288, %s289, %s290
    %p294 = pneg %p288
    %p295 = scmp.eq.s32.totalorder %s17, 1
    %p296 = por %p294, %p295
    %p297 = scmp.ne.s32.totalorder %s289, %s292
    %p298 = scmp.eq.s32.totalorder %s17, 0
    %p299 = por %p297, %p298
    %p300 = scmp.ne.s32.totalorder %s289, %s292
    %p301 = scmp.eq.s32.totalorder %s22, 1
    %p302 = por %p300, %p301
    %p303 = scmp.ne.s32.totalorder %s292, %s293
    %p304 = scmp.eq.s32.totalorder %s22, 0
    %p305 = por %p303, %p304
    %p306 = scmp.ne.s32.totalorder %s292, %s293
    %p307 = scmp.eq.s32.totalorder %s23, 1
    %p308 = por %p306, %p307
    %p310 = scmp.ne.s32.totalorder %s293, %s309
    %p311 = scmp.eq.s32.totalorder %s23, 0
    %p312 = por %p310, %p311
    %p313 = scmp.le.s32.totalorder 1, %s17
    %p314 = scmp.lt.s32.totalorder %s17, 3
    %p315 = pnand %p313, %p314
    %p316 = pneg %p315
    // Predicated region
    $region9: #{tpu_custom_call.1} parent=5 // pred_check
      _
    $region10: #{tpu_custom_call.1} parent=5 // pred_check_branch
      %318 = sbr.rel (%p315) target = $region12
    $region11: #{tpu_custom_call.1} parent=5 // pred_region
      %s319 = ssub.s32 %s17, 1
      // Predicated region
      $region13: #{tpu_custom_call.1} parent=11 // pred_check
        %p320 = pneg %p78
      $region14: #{tpu_custom_call.1} parent=11 // pred_check_branch
        %322 = sbr.rel (%p320) target = $region16
      $region15: #{tpu_custom_call.1} parent=11 // pred_region
        _
      $region16: #{tpu_custom_call.1} parent=11 // pred_fallthru
        _
      // Predicated region
      $region17: #{tpu_custom_call.1} parent=11 // pred_check
        %p323 = pneg %p99
      $region18: #{tpu_custom_call.1} parent=11 // pred_check_branch
        %325 = sbr.rel (%p323) target = $region20
      $region19: #{tpu_custom_call.1} parent=11 // pred_region
        _
      $region20: #{tpu_custom_call.1} parent=11 // pred_fallthru
        _
      // Predicated region
      $region21: #{tpu_custom_call.1} parent=11 // pred_check
        %p326 = pneg %p120
      $region22: #{tpu_custom_call.1} parent=11 // pred_check_branch
        %328 = sbr.rel (%p326) target = $region24
      $region23: #{tpu_custom_call.1} parent=11 // pred_region
        _
      $region24: #{tpu_custom_call.1} parent=11 // pred_fallthru
        _
      // Predicated region
      $region25: #{tpu_custom_call.1} parent=11 // pred_check
        %p329 = pneg %p141
      $region26: #{tpu_custom_call.1} parent=11 // pred_check_branch
        %331 = sbr.rel (%p329) target = $region28
      $region27: #{tpu_custom_call.1} parent=11 // pred_region
        _
      $region28: #{tpu_custom_call.1} parent=11 // pred_fallthru
        _
      // Predicated region
      $region29: #{tpu_custom_call.1} parent=11 // pred_check
        %p332 = pneg %p162
      $region30: #{tpu_custom_call.1} parent=11 // pred_check_branch
        %334 = sbr.rel (%p332) target = $region32
      $region31: #{tpu_custom_call.1} parent=11 // pred_region
        _
      $region32: #{tpu_custom_call.1} parent=11 // pred_fallthru
        _
      // Predicated region
      $region33: #{tpu_custom_call.1} parent=11 // pred_check
        %p335 = pneg %p183
      $region34: #{tpu_custom_call.1} parent=11 // pred_check_branch
        %337 = sbr.rel (%p335) target = $region36
      $region35: #{tpu_custom_call.1} parent=11 // pred_region
        _
      $region36: #{tpu_custom_call.1} parent=11 // pred_fallthru
        _
      // Predicated region
      $region37: #{tpu_custom_call.1} parent=11 // pred_check
        %p338 = pneg %p256
      $region38: #{tpu_custom_call.1} parent=11 // pred_check_branch
        %340 = sbr.rel (%p338) target = $region40
      $region39: #{tpu_custom_call.1} parent=11 // pred_region
        _
      $region40: #{tpu_custom_call.1} parent=11 // pred_fallthru
        _
      // Predicated region
      $region41: #{tpu_custom_call.1} parent=11 // pred_check
        %p341 = pneg %p277
      $region42: #{tpu_custom_call.1} parent=11 // pred_check_branch
        %343 = sbr.rel (%p341) target = $region44
      $region43: #{tpu_custom_call.1} parent=11 // pred_region
        _
      $region44: #{tpu_custom_call.1} parent=11 // pred_fallthru
        _
    $region12: #{tpu_custom_call.1} parent=5 // pred_fallthru
      _
    %p344 = scmp.lt.s32.totalorder %s17, 2
    // Predicated region
    $region45: #{tpu_custom_call.1} parent=5 // pred_check
      %p345 = pneg %p344
    $region46: #{tpu_custom_call.1} parent=5 // pred_check_branch
      %347 = sbr.rel (%p345) target = $region48
    $region47: #{tpu_custom_call.1} parent=5 // pred_region
      // Predicated region
      $region49: #{tpu_custom_call.1} parent=47 // pred_check
        %p348 = pneg %p51
      $region50: #{tpu_custom_call.1} parent=47 // pred_check_branch
        %350 = sbr.rel (%p348) target = $region52
      $region51: #{tpu_custom_call.1} parent=47 // pred_region
        %s351 = smul.u32 2, %s25
        %p352 = scmp.lt.s32.totalorder %s24, 1
        %s353 = scalar_select %p352, %s24, 1
        %p354 = scmp.lt.s32.totalorder %s351, 1
        %s355 = scalar_select %p354, %s351, 1
        %s356 = smul.addr %s353, 2
        %s357 = sadd.s32 %s355, %s356
        %s358 = smul.addr %s357, 2
        %s359 = scalar_lea.vmem %s0, %s358
        %s360 = smul.u32 2, %s25
      $region52: #{tpu_custom_call.1} parent=47 // pred_fallthru
        _
      // Predicated region
      $region53: #{tpu_custom_call.1} parent=47 // pred_check
        %p361 = pneg %p203
      $region54: #{tpu_custom_call.1} parent=47 // pred_check_branch
        %363 = sbr.rel (%p361) target = $region56
      $region55: #{tpu_custom_call.1} parent=47 // pred_region
        %p364 = scmp.lt.s32.totalorder %s24, 1
        %s365 = scalar_select %p364, %s24, 1
        %s366 = smul.addr %s365, 4
        %s367 = smul.addr %s366, 8
        %s368 = scalar_lea.vmem %s7, %s367
      $region56: #{tpu_custom_call.1} parent=47 // pred_fallthru
        _
      // Predicated region
      $region57: #{tpu_custom_call.1} parent=47 // pred_check
        %p369 = pneg %p229
      $region58: #{tpu_custom_call.1} parent=47 // pred_check_branch
        %371 = sbr.rel (%p369) target = $region60
      $region59: #{tpu_custom_call.1} parent=47 // pred_region
        %p372 = scmp.lt.s32.totalorder %s24, 1
        %s373 = scalar_select %p372, %s24, 1
        %s374 = smul.addr %s373, 4
        %s375 = smul.addr %s374, 8
        %s376 = scalar_lea.vmem %s8, %s375
      $region60: #{tpu_custom_call.1} parent=47 // pred_fallthru
        _
    $region48: #{tpu_custom_call.1} parent=5 // pred_fallthru
      _
    %p377 = scmp.le.s32.totalorder 1, %s17
    %p378 = scmp.lt.s32.totalorder %s17, 3
    %p379 = pnand %p377, %p378
    %p380 = pneg %p379
    // Predicated region
    $region61: #{tpu_custom_call.1} parent=5 // pred_check
      _
    $region62: #{tpu_custom_call.1} parent=5 // pred_check_branch
      %382 = sbr.rel (%p379) target = $region64
    $region63: #{tpu_custom_call.1} parent=5 // pred_region
      %s383 = ssub.s32 %s17, 1
      %s384 = smul.u32 2, %s27
      %p385 = scmp.lt.s32.totalorder %s26, 1
      %s386 = scalar_select %p385, %s26, 1
      %p387 = scmp.lt.s32.totalorder %s384, 1
      %s388 = scalar_select %p387, %s384, 1
      %s389 = smul.addr %s386, 2
      %s390 = sadd.s32 %s388, %s389
      %s391 = smul.addr %s390, 2
      %s392 = scalar_lea.vmem %s0, %s391
      %p393 = pneg %p57
      %p394 = pneg %p54
      %p395 = pneg %p78
      %p396 = pneg %p75
      %p397 = pneg %p99
      %p398 = pneg %p96
      %p399 = pneg %p120
      %p400 = pneg %p117
      %p401 = pneg %p141
      %p402 = pneg %p138
      %p403 = pneg %p162
      %p404 = pneg %p159
      %p405 = pneg %p183
      %p406 = pneg %p180
      %p407 = scmp.lt.s32.totalorder %s26, 1
      %s408 = scalar_select %p407, %s26, 1
      %s409 = smul.addr %s408, 4
      %s410 = smul.addr %s409, 8
      %s411 = scalar_lea.vmem %s7, %s410
      %p412 = pneg %p209
      %p413 = pneg %p206
      %p414 = scmp.lt.s32.totalorder %s26, 1
      %s415 = scalar_select %p414, %s26, 1
      %s416 = smul.addr %s415, 4
      %s417 = smul.addr %s416, 8
      %s418 = scalar_lea.vmem %s8, %s417
      %p419 = pneg %p235
      %p420 = pneg %p232
      %p421 = pneg %p256
      %p422 = pneg %p253
      %p423 = pneg %p277
      %p424 = pneg %p274
      %p425 = pneg %p305
      %p426 = pneg %p302
      %s427 = smul.u32 2, %s27
      %p428 = scmp.lt.s32.totalorder %s26, 1
      %s429 = scalar_select %p428, %s26, 1
      %p430 = scmp.lt.s32.totalorder %s427, 1
      %s431 = scalar_select %p430, %s427, 1
      %s432 = smul.addr %s429, 2
      %s433 = sadd.s32 %s431, %s432
      %s434 = smul.addr %s433, 4
      %s435 = scalar_lea.vmem %s11, %s434
      %s436 = smul.u32 2, %s27
      %p437 = scmp.lt.s32.totalorder %s26, 1
      %s438 = scalar_select %p437, %s26, 1
      %p439 = scmp.lt.s32.totalorder %s436, 1
      %s440 = scalar_select %p439, %s436, 1
      %s441 = smul.addr %s438, 2
      %s442 = sadd.s32 %s440, %s441
      %s443 = smul.addr %s442, 2
      %s444 = scalar_lea.vmem %s0, %s443
      %s445 = smul.u32 2, %s27
      %p446 = scmp.lt.s32.totalorder %s26, 1
      %s447 = scalar_select %p446, %s26, 1
      %s448 = smul.addr %s447, 4
      %s449 = smul.addr %s448, 8
      %s450 = scalar_lea.vmem %s7, %s449
      %p451 = scmp.lt.s32.totalorder %s26, 1
      %s452 = scalar_select %p451, %s26, 1
      %s453 = smul.addr %s452, 4
      %s454 = smul.addr %s453, 8
      %s455 = scalar_lea.vmem %s8, %s454
      %s456 = smul.u32 2, %s27
      %p457 = scmp.lt.s32.totalorder %s26, 1
      %s458 = scalar_select %p457, %s26, 1
      %p459 = scmp.lt.s32.totalorder %s456, 1
      %s460 = scalar_select %p459, %s456, 1
      %s461 = smul.addr %s458, 2
      %s462 = sadd.s32 %s460, %s461
      %s463 = smul.addr %s462, 4
      %s464 = scalar_lea.vmem %s11, %s463
      %s465 = smul.u32 2, %s27
      %v466 = vld [vmem:[%s444] sm:$0xf]
      %v467 = vld [vmem:[%s1] sm:$0xf]
      %v468 = vld [vmem:[%s6] sm:$0xff]
      %v469 = vld [vmem:[%s6 + $0x8] sm:$0xff]
      %v470 = vld [vmem:[%s6 + $0x10] sm:$0xff]
      %v471 = vld [vmem:[%s6 + $0x18] sm:$0xff]
      %473 = vset.pattern.permute.xlu0 0
      %474 = vperm.xlu0 %473, %v467
      %v475 = vpop.permute.xlu0 %474
      %v478 = vperm.slane %v466, 0
      %v479 = vperm.slane %v466, 2
      %v482 = vperm.slane %v478, 0
      %v483 = vperm.slane %v479, 0
      %v484 = vmul.f32 %v475, %v482
      %v485 = vmul.f32 %v475, %v483
      %v486 = vand.u32 2147483647, %v484
      %vm487 = vcmp.le.f32.partialorder %v486, 0.7853982
      %vm488 = vcmp.lt.s32.totalorder %v484, 0
      %v489 = vand.u32 %v484, 2139095040
      %v490 = vshrl.u32 %v489, 23
      %v491 = vsub.s32 %v490, 127
      %v492 = vand.u32 2147483647, %v484
      %v493 = vand.u32 %v492, 8388607
      %v494 = vor.u32 %v493, 8388608
      %v495 = vsub.s32 0, %v494
      %v496 = vadd.s32 %v491, 1
      %vm497 = vcmp.gt.s32.totalorder %v496, 0
      %v498 = vsel %vm497, %v496, 0
      %v499 = vshrl.u32 %v498, 5
      %v500 = vand.u32 %v498, 31
      %v501 = vsub.s32 32, %v500
      %v502 = vshrl.u32 683565275, %v501
      %v503 = vshll.u32 683565275, %v500
      %v504 = vshrl.u32 2475754826, %v501
      %v505 = vor.u32 %v503, %v504
      %v506 = vshll.u32 2475754826, %v500
      %v507 = vshrl.u32 2131351028, %v501
      %v508 = vor.u32 %v506, %v507
      %v509 = vshll.u32 2131351028, %v500
      %v510 = vshrl.u32 2102212464, %v501
      %v511 = vor.u32 %v509, %v510
      %v512 = vshll.u32 2102212464, %v500
      %v513 = vshrl.u32 920167782, %v501
      %v514 = vor.u32 %v512, %v513
      %v515 = vshll.u32 920167782, %v500
      %v516 = vshrl.u32 1326507024, %v501
      %v517 = vor.u32 %v515, %v516
      %vm518 = vcmp.lt.s32.totalorder %v499, 1
      %vm519 = vcmp.lt.s32.totalorder %v499, 2
      %vm520 = vcmp.lt.s32.totalorder %v499, 3
      %vm521 = vcmp.lt.s32.totalorder %v499, 4
      %v522 = vsel %vm518, %v502, %v505
      %v523 = vsel %vm521, %v511, 2102212464
      %v524 = vsel %vm520, %v508, %v523
      %v525 = vsel %vm519, %v522, %v524
      %v526 = vsel %vm518, %v505, %v508
      %v527 = vsel %vm521, %v514, 920167782
      %v528 = vsel %vm520, %v511, %v527
      %v529 = vsel %vm519, %v526, %v528
      %v530 = vsel %vm518, %v508, %v511
      %v531 = vsel %vm521, %v517, 1326507024
      %v532 = vsel %vm520, %v514, %v531
      %v533 = vsel %vm519, %v530, %v532
      %v534 = vshll.u32 %v494, 8
      %v535 = vand.u32 %v534, 65535
      %v536 = vshrl.u32 %v534, 16
      %v537 = vand.u32 %v533, 65535
      %v538 = vshrl.u32 %v533, 16
      %v539 = vmul.u32 %v535, %v537
      %v540 = vmul.u32 %v535, %v538
      %v541 = vmul.u32 %v536, %v537
      %v542 = vmul.u32 %v536, %v538
      %v543 = vshll.u32 %v540, 16
      %v544 = vshrl.u32 %v540, 16
      %v545 = vshll.u32 %v541, 16
      %v546 = vshrl.u32 %v541, 16
      %vm547 = vc.u32 %v539, %v543
      %v548 = vsel %vm547, 1, 0
      %v549 = vadd.s32 %v539, %v543
      %v550 = vadd.s32 %v542, %v548
      %vm551 = vc.u32 %v549, %v545
      %v552 = vsel %vm551, 1, 0
      %v553 = vadd.s32 %v549, %v545
      %v554 = vadd.s32 %v550, %v552
      %v555 = vadd.s32 %v554, %v544
      %v556 = vadd.s32 %v555, %v546
      %v557 = vand.u32 %v534, 65535
      %v558 = vshrl.u32 %v534, 16
      %v559 = vand.u32 %v529, 65535
      %v560 = vshrl.u32 %v529, 16
      %v561 = vmul.u32 %v557, %v559
      %v562 = vmul.u32 %v557, %v560
      %v563 = vmul.u32 %v558, %v559
      %v564 = vmul.u32 %v558, %v560
      %v565 = vshll.u32 %v562, 16
      %v566 = vshrl.u32 %v562, 16
      %v567 = vshll.u32 %v563, 16
      %v568 = vshrl.u32 %v563, 16
      %vm569 = vc.u32 %v561, %v565
      %v570 = vsel %vm569, 1, 0
      %v571 = vadd.s32 %v561, %v565
      %v572 = vadd.s32 %v564, %v570
      %vm573 = vc.u32 %v571, %v567
      %v574 = vsel %vm573, 1, 0
      %v575 = vadd.s32 %v571, %v567
      %v576 = vadd.s32 %v572, %v574
      %v577 = vadd.s32 %v576, %v566
      %v578 = vadd.s32 %v577, %v568
      %v579 = vmul.u32 %v534, %v525
      %v580 = vadd.s32 %v556, %v575
      %vm581 = vc.u32 %v556, %v575
      %v582 = vadd.s32 %v578, 1
      %v583 = vsel %vm581, %v582, %v578
      %v584 = vadd.s32 %v579, %v583
      %v585 = vadd.s32 %v584, 536870912
      %v586 = vshrl.u32 %v585, 30
      %v587 = vshll.u32 %v586, 30
      %v588 = vsub.s32 %v584, %v587
      %vm589 = vcmp.lt.s32.totalorder %v588, 0
      %v590 = vsub.s32 0, %v588
      %v591 = vsel %vm589, %v590, %v588
      %v592 = vclz %v591
      %v593 = vsub.s32 %v592, 2
      %vm594 = vcmp.gt.s32.totalorder 0, %v593
      %v595 = vsel %vm594, 0, %v593
      %v596 = vsub.s32 32, %v595
      %v597 = vshll.u32 %v588, %v595
      %v598 = vshrl.u32 %v580, %v596
      %v599 = vor.u32 %v597, %v598
      %v600 = vsub.s32 4294967266, %v595
      %v601 = vadd.s32 %v600, 127
      %v602 = vshll.u32 %v601, 23
      %v603 = vor.u32 4788187, %v602
      %v604 = vand.u32 2147483647, %v603
      %v606 = vcvt.s32.f32 %v599
      %v607 = vmul.f32 %v606, %v604
      %v608 = vxor.u32 %v607, 2147483648
      %v609 = vsel %vm488, %v608, %v607
      %v610 = vsub.s32 4, %v586
      %v611 = vsel %vm488, %v610, %v586
      %v612 = vsel %vm487, %v484, %v609
      %v613 = vsel %vm487, 0, %v611
      %v614 = vmul.f32 %v612, %v612
      %v615 = vmul.f32 %v614, -0.001358992
      %v616 = vadd.f32 %v615, 0.041655596
      %v617 = vmul.f32 %v614, %v616
      %v618 = vadd.f32 %v617, -0.4999988
      %v619 = vmul.f32 %v614, %v618
      %v620 = vadd.f32 1.0, %v619
      %v621 = vmul.f32 %v612, %v612
      %v622 = vmul.f32 %v621, -0.00019511016
      %v623 = vadd.f32 %v622, 0.008332121
      %v624 = vmul.f32 %v621, %v623
      %v625 = vadd.f32 %v624, -0.16666654
      %v626 = vmul.f32 %v621, %v625
      %v627 = vadd.f32 %v626, 1.0
      %v628 = vmul.f32 %v627, %v612
      %vm629 = vweird.f32 %v484
      %v630 = vand.u32 %v613, 3
      %vm631 = vcmp.lt.s32.totalorder %v630, 2
      %vm632 = vcmp.eq.s32.totalorder %v630, 0
      %v633 = vxor.u32 %v628, 2147483648
      %v634 = vsel %vm632, %v620, %v633
      %vm635 = vcmp.eq.s32.totalorder %v630, 2
      %v636 = vxor.u32 %v620, 2147483648
      %v637 = vsel %vm635, %v636, %v628
      %v638 = vsel %vm631, %v634, %v637
      %v639 = vsel %vm629, nan, %v638
      %v640 = vand.u32 2147483647, %v485
      %vm641 = vcmp.le.f32.partialorder %v640, 0.7853982
      %vm642 = vcmp.lt.s32.totalorder %v485, 0
      %v643 = vand.u32 %v485, 2139095040
      %v644 = vshrl.u32 %v643, 23
      %v645 = vsub.s32 %v644, 127
      %v646 = vand.u32 2147483647, %v485
      %v647 = vand.u32 %v646, 8388607
      %v648 = vor.u32 %v647, 8388608
      %v649 = vsub.s32 0, %v648
      %v650 = vadd.s32 %v645, 1
      %vm651 = vcmp.gt.s32.totalorder %v650, 0
      %v652 = vsel %vm651, %v650, 0
      %v653 = vshrl.u32 %v652, 5
      %v654 = vand.u32 %v652, 31
      %v655 = vsub.s32 32, %v654
      %v656 = vshrl.u32 683565275, %v655
      %v657 = vshll.u32 683565275, %v654
      %v658 = vshrl.u32 2475754826, %v655
      %v659 = vor.u32 %v657, %v658
      %v660 = vshll.u32 2475754826, %v654
      %v661 = vshrl.u32 2131351028, %v655
      %v662 = vor.u32 %v660, %v661
      %v663 = vshll.u32 2131351028, %v654
      %v664 = vshrl.u32 2102212464, %v655
      %v665 = vor.u32 %v663, %v664
      %v666 = vshll.u32 2102212464, %v654
      %v667 = vshrl.u32 920167782, %v655
      %v668 = vor.u32 %v666, %v667
      %v669 = vshll.u32 920167782, %v654
      %v670 = vshrl.u32 1326507024, %v655
      %v671 = vor.u32 %v669, %v670
      %vm672 = vcmp.lt.s32.totalorder %v653, 1
      %vm673 = vcmp.lt.s32.totalorder %v653, 2
      %vm674 = vcmp.lt.s32.totalorder %v653, 3
      %vm675 = vcmp.lt.s32.totalorder %v653, 4
      %v676 = vsel %vm672, %v656, %v659
      %v677 = vsel %vm675, %v665, 2102212464
      %v678 = vsel %vm674, %v662, %v677
      %v679 = vsel %vm673, %v676, %v678
      %v680 = vsel %vm672, %v659, %v662
      %v681 = vsel %vm675, %v668, 920167782
      %v682 = vsel %vm674, %v665, %v681
      %v683 = vsel %vm673, %v680, %v682
      %v684 = vsel %vm672, %v662, %v665
      %v685 = vsel %vm675, %v671, 1326507024
      %v686 = vsel %vm674, %v668, %v685
      %v687 = vsel %vm673, %v684, %v686
      %v688 = vshll.u32 %v648, 8
      %v689 = vand.u32 %v688, 65535
      %v690 = vshrl.u32 %v688, 16
      %v691 = vand.u32 %v687, 65535
      %v692 = vshrl.u32 %v687, 16
      %v693 = vmul.u32 %v689, %v691
      %v694 = vmul.u32 %v689, %v692
      %v695 = vmul.u32 %v690, %v691
      %v696 = vmul.u32 %v690, %v692
      %v697 = vshll.u32 %v694, 16
      %v698 = vshrl.u32 %v694, 16
      %v699 = vshll.u32 %v695, 16
      %v700 = vshrl.u32 %v695, 16
      %vm701 = vc.u32 %v693, %v697
      %v702 = vsel %vm701, 1, 0
      %v703 = vadd.s32 %v693, %v697
      %v704 = vadd.s32 %v696, %v702
      %vm705 = vc.u32 %v703, %v699
      %v706 = vsel %vm705, 1, 0
      %v707 = vadd.s32 %v703, %v699
      %v708 = vadd.s32 %v704, %v706
      %v709 = vadd.s32 %v708, %v698
      %v710 = vadd.s32 %v709, %v700
      %v711 = vand.u32 %v688, 65535
      %v712 = vshrl.u32 %v688, 16
      %v713 = vand.u32 %v683, 65535
      %v714 = vshrl.u32 %v683, 16
      %v715 = vmul.u32 %v711, %v713
      %v716 = vmul.u32 %v711, %v714
      %v717 = vmul.u32 %v712, %v713
      %v718 = vmul.u32 %v712, %v714
      %v719 = vshll.u32 %v716, 16
      %v720 = vshrl.u32 %v716, 16
      %v721 = vshll.u32 %v717, 16
      %v722 = vshrl.u32 %v717, 16
      %vm723 = vc.u32 %v715, %v719
      %v724 = vsel %vm723, 1, 0
      %v725 = vadd.s32 %v715, %v719
      %v726 = vadd.s32 %v718, %v724
      %vm727 = vc.u32 %v725, %v721
      %v728 = vsel %vm727, 1, 0
      %v729 = vadd.s32 %v725, %v721
      %v730 = vadd.s32 %v726, %v728
      %v731 = vadd.s32 %v730, %v720
      %v732 = vadd.s32 %v731, %v722
      %v733 = vmul.u32 %v688, %v679
      %v734 = vadd.s32 %v710, %v729
      %vm735 = vc.u32 %v710, %v729
      %v736 = vadd.s32 %v732, 1
      %v737 = vsel %vm735, %v736, %v732
      %v738 = vadd.s32 %v733, %v737
      %v739 = vadd.s32 %v738, 536870912
      %v740 = vshrl.u32 %v739, 30
      %v741 = vshll.u32 %v740, 30
      %v742 = vsub.s32 %v738, %v741
      %vm743 = vcmp.lt.s32.totalorder %v742, 0
      %v744 = vsub.s32 0, %v742
      %v745 = vsel %vm743, %v744, %v742
      %v746 = vclz %v745
      %v747 = vsub.s32 %v746, 2
      %vm748 = vcmp.gt.s32.totalorder 0, %v747
      %v749 = vsel %vm748, 0, %v747
      %v750 = vsub.s32 32, %v749
      %v751 = vshll.u32 %v742, %v749
      %v752 = vshrl.u32 %v734, %v750
      %v753 = vor.u32 %v751, %v752
      %v754 = vsub.s32 4294967266, %v749
      %v755 = vadd.s32 %v754, 127
      %v756 = vshll.u32 %v755, 23
      %v757 = vor.u32 4788187, %v756
      %v758 = vand.u32 2147483647, %v757
      %v760 = vcvt.s32.f32 %v753
      %v761 = vmul.f32 %v760, %v758
      %v762 = vxor.u32 %v761, 2147483648
      %v763 = vsel %vm642, %v762, %v761
      %v764 = vsub.s32 4, %v740
      %v765 = vsel %vm642, %v764, %v740
      %v766 = vsel %vm641, %v485, %v763
      %v767 = vsel %vm641, 0, %v765
      %v768 = vmul.f32 %v766, %v766
      %v769 = vmul.f32 %v768, -0.001358992
      %v770 = vadd.f32 %v769, 0.041655596
      %v771 = vmul.f32 %v768, %v770
      %v772 = vadd.f32 %v771, -0.4999988
      %v773 = vmul.f32 %v768, %v772
      %v774 = vadd.f32 1.0, %v773
      %v775 = vmul.f32 %v766, %v766
      %v776 = vmul.f32 %v775, -0.00019511016
      %v777 = vadd.f32 %v776, 0.008332121
      %v778 = vmul.f32 %v775, %v777
      %v779 = vadd.f32 %v778, -0.16666654
      %v780 = vmul.f32 %v775, %v779
      %v781 = vadd.f32 %v780, 1.0
      %v782 = vmul.f32 %v781, %v766
      %vm783 = vweird.f32 %v485
      %v784 = vand.u32 %v767, 3
      %vm785 = vcmp.lt.s32.totalorder %v784, 2
      %vm786 = vcmp.eq.s32.totalorder %v784, 0
      %v787 = vxor.u32 %v782, 2147483648
      %v788 = vsel %vm786, %v774, %v787
      %vm789 = vcmp.eq.s32.totalorder %v784, 2
      %v790 = vxor.u32 %v774, 2147483648
      %v791 = vsel %vm789, %v790, %v782
      %v792 = vsel %vm785, %v788, %v791
      %v793 = vsel %vm783, nan, %v792
      %v794 = vand.u32 2147483647, %v484
      %vm795 = vcmp.le.f32.partialorder %v794, 0.7853982
      %vm796 = vcmp.lt.s32.totalorder %v484, 0
      %v797 = vand.u32 %v484, 2139095040
      %v798 = vshrl.u32 %v797, 23
      %v799 = vsub.s32 %v798, 127
      %v800 = vand.u32 2147483647, %v484
      %v801 = vand.u32 %v800, 8388607
      %v802 = vor.u32 %v801, 8388608
      %v803 = vsub.s32 0, %v802
      %v804 = vadd.s32 %v799, 1
      %vm805 = vcmp.gt.s32.totalorder %v804, 0
      %v806 = vsel %vm805, %v804, 0
      %v807 = vshrl.u32 %v806, 5
      %v808 = vand.u32 %v806, 31
      %v809 = vsub.s32 32, %v808
      %v810 = vshrl.u32 683565275, %v809
      %v811 = vshll.u32 683565275, %v808
      %v812 = vshrl.u32 2475754826, %v809
      %v813 = vor.u32 %v811, %v812
      %v814 = vshll.u32 2475754826, %v808
      %v815 = vshrl.u32 2131351028, %v809
      %v816 = vor.u32 %v814, %v815
      %v817 = vshll.u32 2131351028, %v808
      %v818 = vshrl.u32 2102212464, %v809
      %v819 = vor.u32 %v817, %v818
      %v820 = vshll.u32 2102212464, %v808
      %v821 = vshrl.u32 920167782, %v809
      %v822 = vor.u32 %v820, %v821
      %v823 = vshll.u32 920167782, %v808
      %v824 = vshrl.u32 1326507024, %v809
      %v825 = vor.u32 %v823, %v824
      %vm826 = vcmp.lt.s32.totalorder %v807, 1
      %vm827 = vcmp.lt.s32.totalorder %v807, 2
      %vm828 = vcmp.lt.s32.totalorder %v807, 3
      %vm829 = vcmp.lt.s32.totalorder %v807, 4
      %v830 = vsel %vm826, %v810, %v813
      %v831 = vsel %vm829, %v819, 2102212464
      %v832 = vsel %vm828, %v816, %v831
      %v833 = vsel %vm827, %v830, %v832
      %v834 = vsel %vm826, %v813, %v816
      %v835 = vsel %vm829, %v822, 920167782
      %v836 = vsel %vm828, %v819, %v835
      %v837 = vsel %vm827, %v834, %v836
      %v838 = vsel %vm826, %v816, %v819
      %v839 = vsel %vm829, %v825, 1326507024
      %v840 = vsel %vm828, %v822, %v839
      %v841 = vsel %vm827, %v838, %v840
      %v842 = vshll.u32 %v802, 8
      %v843 = vand.u32 %v842, 65535
      %v844 = vshrl.u32 %v842, 16
      %v845 = vand.u32 %v841, 65535
      %v846 = vshrl.u32 %v841, 16
      %v847 = vmul.u32 %v843, %v845
      %v848 = vmul.u32 %v843, %v846
      %v849 = vmul.u32 %v844, %v845
      %v850 = vmul.u32 %v844, %v846
      %v851 = vshll.u32 %v848, 16
      %v852 = vshrl.u32 %v848, 16
      %v853 = vshll.u32 %v849, 16
      %v854 = vshrl.u32 %v849, 16
      %vm855 = vc.u32 %v847, %v851
      %v856 = vsel %vm855, 1, 0
      %v857 = vadd.s32 %v847, %v851
      %v858 = vadd.s32 %v850, %v856
      %vm859 = vc.u32 %v857, %v853
      %v860 = vsel %vm859, 1, 0
      %v861 = vadd.s32 %v857, %v853
      %v862 = vadd.s32 %v858, %v860
      %v863 = vadd.s32 %v862, %v852
      %v864 = vadd.s32 %v863, %v854
      %v865 = vand.u32 %v842, 65535
      %v866 = vshrl.u32 %v842, 16
      %v867 = vand.u32 %v837, 65535
      %v868 = vshrl.u32 %v837, 16
      %v869 = vmul.u32 %v865, %v867
      %v870 = vmul.u32 %v865, %v868
      %v871 = vmul.u32 %v866, %v867
      %v872 = vmul.u32 %v866, %v868
      %v873 = vshll.u32 %v870, 16
      %v874 = vshrl.u32 %v870, 16
      %v875 = vshll.u32 %v871, 16
      %v876 = vshrl.u32 %v871, 16
      %vm877 = vc.u32 %v869, %v873
      %v878 = vsel %vm877, 1, 0
      %v879 = vadd.s32 %v869, %v873
      %v880 = vadd.s32 %v872, %v878
      %vm881 = vc.u32 %v879, %v875
      %v882 = vsel %vm881, 1, 0
      %v883 = vadd.s32 %v879, %v875
      %v884 = vadd.s32 %v880, %v882
      %v885 = vadd.s32 %v884, %v874
      %v886 = vadd.s32 %v885, %v876
      %v887 = vmul.u32 %v842, %v833
      %v888 = vadd.s32 %v864, %v883
      %vm889 = vc.u32 %v864, %v883
      %v890 = vadd.s32 %v886, 1
      %v891 = vsel %vm889, %v890, %v886
      %v892 = vadd.s32 %v887, %v891
      %v893 = vadd.s32 %v892, 536870912
      %v894 = vshrl.u32 %v893, 30
      %v895 = vshll.u32 %v894, 30
      %v896 = vsub.s32 %v892, %v895
      %vm897 = vcmp.lt.s32.totalorder %v896, 0
      %v898 = vsub.s32 0, %v896
      %v899 = vsel %vm897, %v898, %v896
      %v900 = vclz %v899
      %v901 = vsub.s32 %v900, 2
      %vm902 = vcmp.gt.s32.totalorder 0, %v901
      %v903 = vsel %vm902, 0, %v901
      %v904 = vsub.s32 32, %v903
      %v905 = vshll.u32 %v896, %v903
      %v906 = vshrl.u32 %v888, %v904
      %v907 = vor.u32 %v905, %v906
      %v908 = vsub.s32 4294967266, %v903
      %v909 = vadd.s32 %v908, 127
      %v910 = vshll.u32 %v909, 23
      %v911 = vor.u32 4788187, %v910
      %v912 = vand.u32 2147483647, %v911
      %v914 = vcvt.s32.f32 %v907
      %v915 = vmul.f32 %v914, %v912
      %v916 = vxor.u32 %v915, 2147483648
      %v917 = vsel %vm796, %v916, %v915
      %v918 = vsub.s32 4, %v894
      %v919 = vsel %vm796, %v918, %v894
      %v920 = vsel %vm795, %v484, %v917
      %v921 = vsel %vm795, 0, %v919
      %v922 = vmul.f32 %v920, %v920
      %v923 = vmul.f32 %v922, -0.001358992
      %v924 = vadd.f32 %v923, 0.041655596
      %v925 = vmul.f32 %v922, %v924
      %v926 = vadd.f32 %v925, -0.4999988
      %v927 = vmul.f32 %v922, %v926
      %v928 = vadd.f32 1.0, %v927
      %v929 = vmul.f32 %v920, %v920
      %v930 = vmul.f32 %v929, -0.00019511016
      %v931 = vadd.f32 %v930, 0.008332121
      %v932 = vmul.f32 %v929, %v931
      %v933 = vadd.f32 %v932, -0.16666654
      %v934 = vmul.f32 %v929, %v933
      %v935 = vadd.f32 %v934, 1.0
      %v936 = vmul.f32 %v935, %v920
      %vm937 = vweird.f32 %v484
      %v938 = vadd.s32 %v921, 3
      %v939 = vand.u32 %v938, 3
      %vm940 = vcmp.lt.s32.totalorder %v939, 2
      %vm941 = vcmp.eq.s32.totalorder %v939, 0
      %v942 = vxor.u32 %v936, 2147483648
      %v943 = vsel %vm941, %v928, %v942
      %vm944 = vcmp.eq.s32.totalorder %v939, 2
      %v945 = vxor.u32 %v928, 2147483648
      %v946 = vsel %vm944, %v945, %v936
      %v947 = vsel %vm940, %v943, %v946
      %v948 = vsel %vm937, nan, %v947
      %v949 = vand.u32 2147483647, %v485
      %vm950 = vcmp.le.f32.partialorder %v949, 0.7853982
      %vm951 = vcmp.lt.s32.totalorder %v485, 0
      %v952 = vand.u32 %v485, 2139095040
      %v953 = vshrl.u32 %v952, 23
      %v954 = vsub.s32 %v953, 127
      %v955 = vand.u32 2147483647, %v485
      %v956 = vand.u32 %v955, 8388607
      %v957 = vor.u32 %v956, 8388608
      %v958 = vsub.s32 0, %v957
      %v959 = vadd.s32 %v954, 1
      %vm960 = vcmp.gt.s32.totalorder %v959, 0
      %v961 = vsel %vm960, %v959, 0
      %v962 = vshrl.u32 %v961, 5
      %v963 = vand.u32 %v961, 31
      %v964 = vsub.s32 32, %v963
      %v965 = vshrl.u32 683565275, %v964
      %v966 = vshll.u32 683565275, %v963
      %v967 = vshrl.u32 2475754826, %v964
      %v968 = vor.u32 %v966, %v967
      %v969 = vshll.u32 2475754826, %v963
      %v970 = vshrl.u32 2131351028, %v964
      %v971 = vor.u32 %v969, %v970
      %v972 = vshll.u32 2131351028, %v963
      %v973 = vshrl.u32 2102212464, %v964
      %v974 = vor.u32 %v972, %v973
      %v975 = vshll.u32 2102212464, %v963
      %v976 = vshrl.u32 920167782, %v964
      %v977 = vor.u32 %v975, %v976
      %v978 = vshll.u32 920167782, %v963
      %v979 = vshrl.u32 1326507024, %v964
      %v980 = vor.u32 %v978, %v979
      %vm981 = vcmp.lt.s32.totalorder %v962, 1
      %vm982 = vcmp.lt.s32.totalorder %v962, 2
      %vm983 = vcmp.lt.s32.totalorder %v962, 3
      %vm984 = vcmp.lt.s32.totalorder %v962, 4
      %v985 = vsel %vm981, %v965, %v968
      %v986 = vsel %vm984, %v974, 2102212464
      %v987 = vsel %vm983, %v971, %v986
      %v988 = vsel %vm982, %v985, %v987
      %v989 = vsel %vm981, %v968, %v971
      %v990 = vsel %vm984, %v977, 920167782
      %v991 = vsel %vm983, %v974, %v990
      %v992 = vsel %vm982, %v989, %v991
      %v993 = vsel %vm981, %v971, %v974
      %v994 = vsel %vm984, %v980, 1326507024
      %v995 = vsel %vm983, %v977, %v994
      %v996 = vsel %vm982, %v993, %v995
      %v997 = vshll.u32 %v957, 8
      %v998 = vand.u32 %v997, 65535
      %v999 = vshrl.u32 %v997, 16
      %v1000 = vand.u32 %v996, 65535
      %v1001 = vshrl.u32 %v996, 16
      %v1002 = vmul.u32 %v998, %v1000
      %v1003 = vmul.u32 %v998, %v1001
      %v1004 = vmul.u32 %v999, %v1000
      %v1005 = vmul.u32 %v999, %v1001
      %v1006 = vshll.u32 %v1003, 16
      %v1007 = vshrl.u32 %v1003, 16
      %v1008 = vshll.u32 %v1004, 16
      %v1009 = vshrl.u32 %v1004, 16
      %vm1010 = vc.u32 %v1002, %v1006
      %v1011 = vsel %vm1010, 1, 0
      %v1012 = vadd.s32 %v1002, %v1006
      %v1013 = vadd.s32 %v1005, %v1011
      %vm1014 = vc.u32 %v1012, %v1008
      %v1015 = vsel %vm1014, 1, 0
      %v1016 = vadd.s32 %v1012, %v1008
      %v1017 = vadd.s32 %v1013, %v1015
      %v1018 = vadd.s32 %v1017, %v1007
      %v1019 = vadd.s32 %v1018, %v1009
      %v1020 = vand.u32 %v997, 65535
      %v1021 = vshrl.u32 %v997, 16
      %v1022 = vand.u32 %v992, 65535
      %v1023 = vshrl.u32 %v992, 16
      %v1024 = vmul.u32 %v1020, %v1022
      %v1025 = vmul.u32 %v1020, %v1023
      %v1026 = vmul.u32 %v1021, %v1022
      %v1027 = vmul.u32 %v1021, %v1023
      %v1028 = vshll.u32 %v1025, 16
      %v1029 = vshrl.u32 %v1025, 16
      %v1030 = vshll.u32 %v1026, 16
      %v1031 = vshrl.u32 %v1026, 16
      %vm1032 = vc.u32 %v1024, %v1028
      %v1033 = vsel %vm1032, 1, 0
      %v1034 = vadd.s32 %v1024, %v1028
      %v1035 = vadd.s32 %v1027, %v1033
      %vm1036 = vc.u32 %v1034, %v1030
      %v1037 = vsel %vm1036, 1, 0
      %v1038 = vadd.s32 %v1034, %v1030
      %v1039 = vadd.s32 %v1035, %v1037
      %v1040 = vadd.s32 %v1039, %v1029
      %v1041 = vadd.s32 %v1040, %v1031
      %v1042 = vmul.u32 %v997, %v988
      %v1043 = vadd.s32 %v1019, %v1038
      %vm1044 = vc.u32 %v1019, %v1038
      %v1045 = vadd.s32 %v1041, 1
      %v1046 = vsel %vm1044, %v1045, %v1041
      %v1047 = vadd.s32 %v1042, %v1046
      %v1048 = vadd.s32 %v1047, 536870912
      %v1049 = vshrl.u32 %v1048, 30
      %v1050 = vshll.u32 %v1049, 30
      %v1051 = vsub.s32 %v1047, %v1050
      %vm1052 = vcmp.lt.s32.totalorder %v1051, 0
      %v1053 = vsub.s32 0, %v1051
      %v1054 = vsel %vm1052, %v1053, %v1051
      %v1055 = vclz %v1054
      %v1056 = vsub.s32 %v1055, 2
      %vm1057 = vcmp.gt.s32.totalorder 0, %v1056
      %v1058 = vsel %vm1057, 0, %v1056
      %v1059 = vsub.s32 32, %v1058
      %v1060 = vshll.u32 %v1051, %v1058
      %v1061 = vshrl.u32 %v1043, %v1059
      %v1062 = vor.u32 %v1060, %v1061
      %v1063 = vsub.s32 4294967266, %v1058
      %v1064 = vadd.s32 %v1063, 127
      %v1065 = vshll.u32 %v1064, 23
      %v1066 = vor.u32 4788187, %v1065
      %v1067 = vand.u32 2147483647, %v1066
      %v1069 = vcvt.s32.f32 %v1062
      %v1070 = vmul.f32 %v1069, %v1067
      %v1071 = vxor.u32 %v1070, 2147483648
      %v1072 = vsel %vm951, %v1071, %v1070
      %v1073 = vsub.s32 4, %v1049
      %v1074 = vsel %vm951, %v1073, %v1049
      %v1075 = vsel %vm950, %v485, %v1072
      %v1076 = vsel %vm950, 0, %v1074
      %v1077 = vmul.f32 %v1075, %v1075
      %v1078 = vmul.f32 %v1077, -0.001358992
      %v1079 = vadd.f32 %v1078, 0.041655596
      %v1080 = vmul.f32 %v1077, %v1079
      %v1081 = vadd.f32 %v1080, -0.4999988
      %v1082 = vmul.f32 %v1077, %v1081
      %v1083 = vadd.f32 1.0, %v1082
      %v1084 = vmul.f32 %v1075, %v1075
      %v1085 = vmul.f32 %v1084, -0.00019511016
      %v1086 = vadd.f32 %v1085, 0.008332121
      %v1087 = vmul.f32 %v1084, %v1086
      %v1088 = vadd.f32 %v1087, -0.16666654
      %v1089 = vmul.f32 %v1084, %v1088
      %v1090 = vadd.f32 %v1089, 1.0
      %v1091 = vmul.f32 %v1090, %v1075
      %vm1092 = vweird.f32 %v485
      %v1093 = vadd.s32 %v1076, 3
      %v1094 = vand.u32 %v1093, 3
      %vm1095 = vcmp.lt.s32.totalorder %v1094, 2
      %vm1096 = vcmp.eq.s32.totalorder %v1094, 0
      %v1097 = vxor.u32 %v1091, 2147483648
      %v1098 = vsel %vm1096, %v1083, %v1097
      %vm1099 = vcmp.eq.s32.totalorder %v1094, 2
      %v1100 = vxor.u32 %v1083, 2147483648
      %v1101 = vsel %vm1099, %v1100, %v1091
      %v1102 = vsel %vm1095, %v1098, %v1101
      %v1103 = vsel %vm1092, nan, %v1102
      %v1104 = vld [vmem:[%s2] sm:$0xff]
      %v1105 = vld [vmem:[%s2 + $0x8] sm:$0xff]
      %v1106 = vld [vmem:[%s2 + $0x10] sm:$0xff]
      %v1107 = vld [vmem:[%s2 + $0x18] sm:$0xff]
      %v1108 = vld [vmem:[%s4] sm:$0xff]
      %v1109 = vld [vmem:[%s4 + $0x8] sm:$0xff]
      %v1110 = vld [vmem:[%s4 + $0x10] sm:$0xff]
      %v1111 = vld [vmem:[%s4 + $0x18] sm:$0xff]
      %vm1112 = vcmask 31744
      %v1114 = vsel %vm1112, %v1108, 0
      %v1117 = vsel %vm1112, %v1109, 0
      %v1120 = vsel %vm1112, %v1110, 0
      %v1123 = vsel %vm1112, %v1111, 0
      %vm1125 = vcmask 1043456
      %v1127 = vsel %vm1125, %v948, 0
      %v1130 = vsel %vm1125, %v1103, 0
      %1132 = vmatpush.msra.mxu0 0.0
      %1133 = vmatpush.msra.mxu0 0.0
      %1134 = vmatpush.msra.mxu0 0.0
      %1135 = vmatpush.msra.mxu0 0.0
      %1136 = vmatpush.msra.mxu0 0.0
      %1137 = vmatpush.msra.mxu0 0.0
      %1138 = vmatpush.msra.mxu0 0.0
      %1139 = vmatpush.msra.mxu0 0.0
      %1140 = vmatpush.msra.mxu0 0.0
      %1141 = vmatpush.msra.mxu0 0.0
      %1142 = vmatpush.msra.mxu0 0.0
      %1143 = vmatpush.msra.mxu0 0.0
      %1144 = vmatpush.msra.mxu0 0.0
      %1145 = vmatpush.msra.mxu0 0.0
      %1146 = vmatpush.msra.mxu0 0.0
      %1147 = vmatpush.msra.mxu0 %v1127
      %1148 = vmatmul.f32.gmra.mxu0 %v1114
      %v1149 = vpop.f32.mrf.mxu0
      %v1150 = vadd.f32 0.0, %v1149
      %1151 = vmatmul.f32.gmra.mxu0 %v1117
      %v1152 = vpop.f32.mrf.mxu0
      %v1153 = vadd.f32 0.0, %v1152
      %1154 = vmatmul.f32.gmra.mxu0 %v1120
      %v1155 = vpop.f32.mrf.mxu0
      %v1156 = vadd.f32 0.0, %v1155
      %1157 = vmatmul.f32.gmra.mxu0 %v1123
      %v1158 = vpop.f32.mrf.mxu0
      %v1159 = vadd.f32 0.0, %v1158
      %1160 = vdwg.mxu0
      %1161 = vmatpush.msra.mxu0 0.0
      %1162 = vmatpush.msra.mxu0 0.0
      %1163 = vmatpush.msra.mxu0 0.0
      %1164 = vmatpush.msra.mxu0 0.0
      %1165 = vmatpush.msra.mxu0 0.0
      %1166 = vmatpush.msra.mxu0 0.0
      %1167 = vmatpush.msra.mxu0 0.0
      %1168 = vmatpush.msra.mxu0 0.0
      %1169 = vmatpush.msra.mxu0 0.0
      %1170 = vmatpush.msra.mxu0 0.0
      %1171 = vmatpush.msra.mxu0 0.0
      %1172 = vmatpush.msra.mxu0 0.0
      %1173 = vmatpush.msra.mxu0 0.0
      %1174 = vmatpush.msra.mxu0 0.0
      %1175 = vmatpush.msra.mxu0 0.0
      %1176 = vmatpush.msra.mxu0 %v1130
      %1177 = vmatmul.f32.gmra.mxu0 %v1114
      %v1178 = vpop.f32.mrf.mxu0
      %v1179 = vadd.f32 0.0, %v1178
      %1180 = vmatmul.f32.gmra.mxu0 %v1117
      %v1181 = vpop.f32.mrf.mxu0
      %v1182 = vadd.f32 0.0, %v1181
      %1183 = vmatmul.f32.gmra.mxu0 %v1120
      %v1184 = vpop.f32.mrf.mxu0
      %v1185 = vadd.f32 0.0, %v1184
      %1186 = vmatmul.f32.gmra.mxu0 %v1123
      %v1187 = vpop.f32.mrf.mxu0
      %v1188 = vadd.f32 0.0, %v1187
      %1189 = vdwg.mxu0
      %v1191 = vsel %vm1112, %v1104, 0
      %v1194 = vsel %vm1112, %v1105, 0
      %v1197 = vsel %vm1112, %v1106, 0
      %v1200 = vsel %vm1112, %v1107, 0
      %v1203 = vsel %vm1125, %v639, 0
      %v1206 = vsel %vm1125, %v793, 0
      %1208 = vmatpush.msra.mxu0 0.0
      %1209 = vmatpush.msra.mxu0 0.0
      %1210 = vmatpush.msra.mxu0 0.0
      %1211 = vmatpush.msra.mxu0 0.0
      %1212 = vmatpush.msra.mxu0 0.0
      %1213 = vmatpush.msra.mxu0 0.0
      %1214 = vmatpush.msra.mxu0 0.0
      %1215 = vmatpush.msra.mxu0 0.0
      %1216 = vmatpush.msra.mxu0 0.0
      %1217 = vmatpush.msra.mxu0 0.0
      %1218 = vmatpush.msra.mxu0 0.0
      %1219 = vmatpush.msra.mxu0 0.0
      %1220 = vmatpush.msra.mxu0 0.0
      %1221 = vmatpush.msra.mxu0 0.0
      %1222 = vmatpush.msra.mxu0 0.0
      %1223 = vmatpush.msra.mxu0 %v1203
      %1224 = vmatmul.f32.gmra.mxu0 %v1191
      %v1225 = vpop.f32.mrf.mxu0
      %v1226 = vadd.f32 %v1150, %v1225
      %1227 = vmatmul.f32.gmra.mxu0 %v1194
      %v1228 = vpop.f32.mrf.mxu0
      %v1229 = vadd.f32 %v1153, %v1228
      %1230 = vmatmul.f32.gmra.mxu0 %v1197
      %v1231 = vpop.f32.mrf.mxu0
      %v1232 = vadd.f32 %v1156, %v1231
      %1233 = vmatmul.f32.gmra.mxu0 %v1200
      %v1234 = vpop.f32.mrf.mxu0
      %v1235 = vadd.f32 %v1159, %v1234
      %1236 = vdwg.mxu0
      %1237 = vmatpush.msra.mxu0 0.0
      %1238 = vmatpush.msra.mxu0 0.0
      %1239 = vmatpush.msra.mxu0 0.0
      %1240 = vmatpush.msra.mxu0 0.0
      %1241 = vmatpush.msra.mxu0 0.0
      %1242 = vmatpush.msra.mxu0 0.0
      %1243 = vmatpush.msra.mxu0 0.0
      %1244 = vmatpush.msra.mxu0 0.0
      %1245 = vmatpush.msra.mxu0 0.0
      %1246 = vmatpush.msra.mxu0 0.0
      %1247 = vmatpush.msra.mxu0 0.0
      %1248 = vmatpush.msra.mxu0 0.0
      %1249 = vmatpush.msra.mxu0 0.0
      %1250 = vmatpush.msra.mxu0 0.0
      %1251 = vmatpush.msra.mxu0 0.0
      %1252 = vmatpush.msra.mxu0 %v1206
      %1253 = vmatmul.f32.gmra.mxu0 %v1191
      %v1254 = vpop.f32.mrf.mxu0
      %v1255 = vadd.f32 %v1179, %v1254
      %1256 = vmatmul.f32.gmra.mxu0 %v1194
      %v1257 = vpop.f32.mrf.mxu0
      %v1258 = vadd.f32 %v1182, %v1257
      %1259 = vmatmul.f32.gmra.mxu0 %v1197
      %v1260 = vpop.f32.mrf.mxu0
      %v1261 = vadd.f32 %v1185, %v1260
      %1262 = vmatmul.f32.gmra.mxu0 %v1200
      %v1263 = vpop.f32.mrf.mxu0
      %v1264 = vadd.f32 %v1188, %v1263
      %1265 = vdwg.mxu0
      %v1266 = vperm.slane %v466, 1
      %v1267 = vperm.slane %v466, 3
      %v1270 = vperm.slane %v1266, 1
      %v1271 = vperm.slane %v1267, 1
      %v1272 = vmul.f32 %v475, %v1270
      %v1273 = vmul.f32 %v475, %v1271
      %v1274 = vand.u32 2147483647, %v1272
      %vm1275 = vcmp.le.f32.partialorder %v1274, 0.7853982
      %vm1276 = vcmp.lt.s32.totalorder %v1272, 0
      %v1277 = vand.u32 %v1272, 2139095040
      %v1278 = vshrl.u32 %v1277, 23
      %v1279 = vsub.s32 %v1278, 127
      %v1280 = vand.u32 2147483647, %v1272
      %v1281 = vand.u32 %v1280, 8388607
      %v1282 = vor.u32 %v1281, 8388608
      %v1283 = vsub.s32 0, %v1282
      %v1284 = vadd.s32 %v1279, 1
      %vm1285 = vcmp.gt.s32.totalorder %v1284, 0
      %v1286 = vsel %vm1285, %v1284, 0
      %v1287 = vshrl.u32 %v1286, 5
      %v1288 = vand.u32 %v1286, 31
      %v1289 = vsub.s32 32, %v1288
      %v1290 = vshrl.u32 683565275, %v1289
      %v1291 = vshll.u32 683565275, %v1288
      %v1292 = vshrl.u32 2475754826, %v1289
      %v1293 = vor.u32 %v1291, %v1292
      %v1294 = vshll.u32 2475754826, %v1288
      %v1295 = vshrl.u32 2131351028, %v1289
      %v1296 = vor.u32 %v1294, %v1295
      %v1297 = vshll.u32 2131351028, %v1288
      %v1298 = vshrl.u32 2102212464, %v1289
      %v1299 = vor.u32 %v1297, %v1298
      %v1300 = vshll.u32 2102212464, %v1288
      %v1301 = vshrl.u32 920167782, %v1289
      %v1302 = vor.u32 %v1300, %v1301
      %v1303 = vshll.u32 920167782, %v1288
      %v1304 = vshrl.u32 1326507024, %v1289
      %v1305 = vor.u32 %v1303, %v1304
      %vm1306 = vcmp.lt.s32.totalorder %v1287, 1
      %vm1307 = vcmp.lt.s32.totalorder %v1287, 2
      %vm1308 = vcmp.lt.s32.totalorder %v1287, 3
      %vm1309 = vcmp.lt.s32.totalorder %v1287, 4
      %v1310 = vsel %vm1306, %v1290, %v1293
      %v1311 = vsel %vm1309, %v1299, 2102212464
      %v1312 = vsel %vm1308, %v1296, %v1311
      %v1313 = vsel %vm1307, %v1310, %v1312
      %v1314 = vsel %vm1306, %v1293, %v1296
      %v1315 = vsel %vm1309, %v1302, 920167782
      %v1316 = vsel %vm1308, %v1299, %v1315
      %v1317 = vsel %vm1307, %v1314, %v1316
      %v1318 = vsel %vm1306, %v1296, %v1299
      %v1319 = vsel %vm1309, %v1305, 1326507024
      %v1320 = vsel %vm1308, %v1302, %v1319
      %v1321 = vsel %vm1307, %v1318, %v1320
      %v1322 = vshll.u32 %v1282, 8
      %v1323 = vand.u32 %v1322, 65535
      %v1324 = vshrl.u32 %v1322, 16
      %v1325 = vand.u32 %v1321, 65535
      %v1326 = vshrl.u32 %v1321, 16
      %v1327 = vmul.u32 %v1323, %v1325
      %v1328 = vmul.u32 %v1323, %v1326
      %v1329 = vmul.u32 %v1324, %v1325
      %v1330 = vmul.u32 %v1324, %v1326
      %v1331 = vshll.u32 %v1328, 16
      %v1332 = vshrl.u32 %v1328, 16
      %v1333 = vshll.u32 %v1329, 16
      %v1334 = vshrl.u32 %v1329, 16
      %vm1335 = vc.u32 %v1327, %v1331
      %v1336 = vsel %vm1335, 1, 0
      %v1337 = vadd.s32 %v1327, %v1331
      %v1338 = vadd.s32 %v1330, %v1336
      %vm1339 = vc.u32 %v1337, %v1333
      %v1340 = vsel %vm1339, 1, 0
      %v1341 = vadd.s32 %v1337, %v1333
      %v1342 = vadd.s32 %v1338, %v1340
      %v1343 = vadd.s32 %v1342, %v1332
      %v1344 = vadd.s32 %v1343, %v1334
      %v1345 = vand.u32 %v1322, 65535
      %v1346 = vshrl.u32 %v1322, 16
      %v1347 = vand.u32 %v1317, 65535
      %v1348 = vshrl.u32 %v1317, 16
      %v1349 = vmul.u32 %v1345, %v1347
      %v1350 = vmul.u32 %v1345, %v1348
      %v1351 = vmul.u32 %v1346, %v1347
      %v1352 = vmul.u32 %v1346, %v1348
      %v1353 = vshll.u32 %v1350, 16
      %v1354 = vshrl.u32 %v1350, 16
      %v1355 = vshll.u32 %v1351, 16
      %v1356 = vshrl.u32 %v1351, 16
      %vm1357 = vc.u32 %v1349, %v1353
      %v1358 = vsel %vm1357, 1, 0
      %v1359 = vadd.s32 %v1349, %v1353
      %v1360 = vadd.s32 %v1352, %v1358
      %vm1361 = vc.u32 %v1359, %v1355
      %v1362 = vsel %vm1361, 1, 0
      %v1363 = vadd.s32 %v1359, %v1355
      %v1364 = vadd.s32 %v1360, %v1362
      %v1365 = vadd.s32 %v1364, %v1354
      %v1366 = vadd.s32 %v1365, %v1356
      %v1367 = vmul.u32 %v1322, %v1313
      %v1368 = vadd.s32 %v1344, %v1363
      %vm1369 = vc.u32 %v1344, %v1363
      %v1370 = vadd.s32 %v1366, 1
      %v1371 = vsel %vm1369, %v1370, %v1366
      %v1372 = vadd.s32 %v1367, %v1371
      %v1373 = vadd.s32 %v1372, 536870912
      %v1374 = vshrl.u32 %v1373, 30
      %v1375 = vshll.u32 %v1374, 30
      %v1376 = vsub.s32 %v1372, %v1375
      %vm1377 = vcmp.lt.s32.totalorder %v1376, 0
      %v1378 = vsub.s32 0, %v1376
      %v1379 = vsel %vm1377, %v1378, %v1376
      %v1380 = vclz %v1379
      %v1381 = vsub.s32 %v1380, 2
      %vm1382 = vcmp.gt.s32.totalorder 0, %v1381
      %v1383 = vsel %vm1382, 0, %v1381
      %v1384 = vsub.s32 32, %v1383
      %v1385 = vshll.u32 %v1376, %v1383
      %v1386 = vshrl.u32 %v1368, %v1384
      %v1387 = vor.u32 %v1385, %v1386
      %v1388 = vsub.s32 4294967266, %v1383
      %v1389 = vadd.s32 %v1388, 127
      %v1390 = vshll.u32 %v1389, 23
      %v1391 = vor.u32 4788187, %v1390
      %v1392 = vand.u32 2147483647, %v1391
      %v1394 = vcvt.s32.f32 %v1387
      %v1395 = vmul.f32 %v1394, %v1392
      %v1396 = vxor.u32 %v1395, 2147483648
      %v1397 = vsel %vm1276, %v1396, %v1395
      %v1398 = vsub.s32 4, %v1374
      %v1399 = vsel %vm1276, %v1398, %v1374
      %v1400 = vsel %vm1275, %v1272, %v1397
      %v1401 = vsel %vm1275, 0, %v1399
      %v1402 = vmul.f32 %v1400, %v1400
      %v1403 = vmul.f32 %v1402, -0.001358992
      %v1404 = vadd.f32 %v1403, 0.041655596
      %v1405 = vmul.f32 %v1402, %v1404
      %v1406 = vadd.f32 %v1405, -0.4999988
      %v1407 = vmul.f32 %v1402, %v1406
      %v1408 = vadd.f32 1.0, %v1407
      %v1409 = vmul.f32 %v1400, %v1400
      %v1410 = vmul.f32 %v1409, -0.00019511016
      %v1411 = vadd.f32 %v1410, 0.008332121
      %v1412 = vmul.f32 %v1409, %v1411
      %v1413 = vadd.f32 %v1412, -0.16666654
      %v1414 = vmul.f32 %v1409, %v1413
      %v1415 = vadd.f32 %v1414, 1.0
      %v1416 = vmul.f32 %v1415, %v1400
      %vm1417 = vweird.f32 %v1272
      %v1418 = vand.u32 %v1401, 3
      %vm1419 = vcmp.lt.s32.totalorder %v1418, 2
      %vm1420 = vcmp.eq.s32.totalorder %v1418, 0
      %v1421 = vxor.u32 %v1416, 2147483648
      %v1422 = vsel %vm1420, %v1408, %v1421
      %vm1423 = vcmp.eq.s32.totalorder %v1418, 2
      %v1424 = vxor.u32 %v1408, 2147483648
      %v1425 = vsel %vm1423, %v1424, %v1416
      %v1426 = vsel %vm1419, %v1422, %v1425
      %v1427 = vsel %vm1417, nan, %v1426
      %v1428 = vand.u32 2147483647, %v1273
      %vm1429 = vcmp.le.f32.partialorder %v1428, 0.7853982
      %vm1430 = vcmp.lt.s32.totalorder %v1273, 0
      %v1431 = vand.u32 %v1273, 2139095040
      %v1432 = vshrl.u32 %v1431, 23
      %v1433 = vsub.s32 %v1432, 127
      %v1434 = vand.u32 2147483647, %v1273
      %v1435 = vand.u32 %v1434, 8388607
      %v1436 = vor.u32 %v1435, 8388608
      %v1437 = vsub.s32 0, %v1436
      %v1438 = vadd.s32 %v1433, 1
      %vm1439 = vcmp.gt.s32.totalorder %v1438, 0
      %v1440 = vsel %vm1439, %v1438, 0
      %v1441 = vshrl.u32 %v1440, 5
      %v1442 = vand.u32 %v1440, 31
      %v1443 = vsub.s32 32, %v1442
      %v1444 = vshrl.u32 683565275, %v1443
      %v1445 = vshll.u32 683565275, %v1442
      %v1446 = vshrl.u32 2475754826, %v1443
      %v1447 = vor.u32 %v1445, %v1446
      %v1448 = vshll.u32 2475754826, %v1442
      %v1449 = vshrl.u32 2131351028, %v1443
      %v1450 = vor.u32 %v1448, %v1449
      %v1451 = vshll.u32 2131351028, %v1442
      %v1452 = vshrl.u32 2102212464, %v1443
      %v1453 = vor.u32 %v1451, %v1452
      %v1454 = vshll.u32 2102212464, %v1442
      %v1455 = vshrl.u32 920167782, %v1443
      %v1456 = vor.u32 %v1454, %v1455
      %v1457 = vshll.u32 920167782, %v1442
      %v1458 = vshrl.u32 1326507024, %v1443
      %v1459 = vor.u32 %v1457, %v1458
      %vm1460 = vcmp.lt.s32.totalorder %v1441, 1
      %vm1461 = vcmp.lt.s32.totalorder %v1441, 2
      %vm1462 = vcmp.lt.s32.totalorder %v1441, 3
      %vm1463 = vcmp.lt.s32.totalorder %v1441, 4
      %v1464 = vsel %vm1460, %v1444, %v1447
      %v1465 = vsel %vm1463, %v1453, 2102212464
      %v1466 = vsel %vm1462, %v1450, %v1465
      %v1467 = vsel %vm1461, %v1464, %v1466
      %v1468 = vsel %vm1460, %v1447, %v1450
      %v1469 = vsel %vm1463, %v1456, 920167782
      %v1470 = vsel %vm1462, %v1453, %v1469
      %v1471 = vsel %vm1461, %v1468, %v1470
      %v1472 = vsel %vm1460, %v1450, %v1453
      %v1473 = vsel %vm1463, %v1459, 1326507024
      %v1474 = vsel %vm1462, %v1456, %v1473
      %v1475 = vsel %vm1461, %v1472, %v1474
      %v1476 = vshll.u32 %v1436, 8
      %v1477 = vand.u32 %v1476, 65535
      %v1478 = vshrl.u32 %v1476, 16
      %v1479 = vand.u32 %v1475, 65535
      %v1480 = vshrl.u32 %v1475, 16
      %v1481 = vmul.u32 %v1477, %v1479
      %v1482 = vmul.u32 %v1477, %v1480
      %v1483 = vmul.u32 %v1478, %v1479
      %v1484 = vmul.u32 %v1478, %v1480
      %v1485 = vshll.u32 %v1482, 16
      %v1486 = vshrl.u32 %v1482, 16
      %v1487 = vshll.u32 %v1483, 16
      %v1488 = vshrl.u32 %v1483, 16
      %vm1489 = vc.u32 %v1481, %v1485
      %v1490 = vsel %vm1489, 1, 0
      %v1491 = vadd.s32 %v1481, %v1485
      %v1492 = vadd.s32 %v1484, %v1490
      %vm1493 = vc.u32 %v1491, %v1487
      %v1494 = vsel %vm1493, 1, 0
      %v1495 = vadd.s32 %v1491, %v1487
      %v1496 = vadd.s32 %v1492, %v1494
      %v1497 = vadd.s32 %v1496, %v1486
      %v1498 = vadd.s32 %v1497, %v1488
      %v1499 = vand.u32 %v1476, 65535
      %v1500 = vshrl.u32 %v1476, 16
      %v1501 = vand.u32 %v1471, 65535
      %v1502 = vshrl.u32 %v1471, 16
      %v1503 = vmul.u32 %v1499, %v1501
      %v1504 = vmul.u32 %v1499, %v1502
      %v1505 = vmul.u32 %v1500, %v1501
      %v1506 = vmul.u32 %v1500, %v1502
      %v1507 = vshll.u32 %v1504, 16
      %v1508 = vshrl.u32 %v1504, 16
      %v1509 = vshll.u32 %v1505, 16
      %v1510 = vshrl.u32 %v1505, 16
      %vm1511 = vc.u32 %v1503, %v1507
      %v1512 = vsel %vm1511, 1, 0
      %v1513 = vadd.s32 %v1503, %v1507
      %v1514 = vadd.s32 %v1506, %v1512
      %vm1515 = vc.u32 %v1513, %v1509
      %v1516 = vsel %vm1515, 1, 0
      %v1517 = vadd.s32 %v1513, %v1509
      %v1518 = vadd.s32 %v1514, %v1516
      %v1519 = vadd.s32 %v1518, %v1508
      %v1520 = vadd.s32 %v1519, %v1510
      %v1521 = vmul.u32 %v1476, %v1467
      %v1522 = vadd.s32 %v1498, %v1517
      %vm1523 = vc.u32 %v1498, %v1517
      %v1524 = vadd.s32 %v1520, 1
      %v1525 = vsel %vm1523, %v1524, %v1520
      %v1526 = vadd.s32 %v1521, %v1525
      %v1527 = vadd.s32 %v1526, 536870912
      %v1528 = vshrl.u32 %v1527, 30
      %v1529 = vshll.u32 %v1528, 30
      %v1530 = vsub.s32 %v1526, %v1529
      %vm1531 = vcmp.lt.s32.totalorder %v1530, 0
      %v1532 = vsub.s32 0, %v1530
      %v1533 = vsel %vm1531, %v1532, %v1530
      %v1534 = vclz %v1533
      %v1535 = vsub.s32 %v1534, 2
      %vm1536 = vcmp.gt.s32.totalorder 0, %v1535
      %v1537 = vsel %vm1536, 0, %v1535
      %v1538 = vsub.s32 32, %v1537
      %v1539 = vshll.u32 %v1530, %v1537
      %v1540 = vshrl.u32 %v1522, %v1538
      %v1541 = vor.u32 %v1539, %v1540
      %v1542 = vsub.s32 4294967266, %v1537
      %v1543 = vadd.s32 %v1542, 127
      %v1544 = vshll.u32 %v1543, 23
      %v1545 = vor.u32 4788187, %v1544
      %v1546 = vand.u32 2147483647, %v1545
      %v1548 = vcvt.s32.f32 %v1541
      %v1549 = vmul.f32 %v1548, %v1546
      %v1550 = vxor.u32 %v1549, 2147483648
      %v1551 = vsel %vm1430, %v1550, %v1549
      %v1552 = vsub.s32 4, %v1528
      %v1553 = vsel %vm1430, %v1552, %v1528
      %v1554 = vsel %vm1429, %v1273, %v1551
      %v1555 = vsel %vm1429, 0, %v1553
      %v1556 = vmul.f32 %v1554, %v1554
      %v1557 = vmul.f32 %v1556, -0.001358992
      %v1558 = vadd.f32 %v1557, 0.041655596
      %v1559 = vmul.f32 %v1556, %v1558
      %v1560 = vadd.f32 %v1559, -0.4999988
      %v1561 = vmul.f32 %v1556, %v1560
      %v1562 = vadd.f32 1.0, %v1561
      %v1563 = vmul.f32 %v1554, %v1554
      %v1564 = vmul.f32 %v1563, -0.00019511016
      %v1565 = vadd.f32 %v1564, 0.008332121
      %v1566 = vmul.f32 %v1563, %v1565
      %v1567 = vadd.f32 %v1566, -0.16666654
      %v1568 = vmul.f32 %v1563, %v1567
      %v1569 = vadd.f32 %v1568, 1.0
      %v1570 = vmul.f32 %v1569, %v1554
      %vm1571 = vweird.f32 %v1273
      %v1572 = vand.u32 %v1555, 3
      %vm1573 = vcmp.lt.s32.totalorder %v1572, 2
      %vm1574 = vcmp.eq.s32.totalorder %v1572, 0
      %v1575 = vxor.u32 %v1570, 2147483648
      %v1576 = vsel %vm1574, %v1562, %v1575
      %vm1577 = vcmp.eq.s32.totalorder %v1572, 2
      %v1578 = vxor.u32 %v1562, 2147483648
      %v1579 = vsel %vm1577, %v1578, %v1570
      %v1580 = vsel %vm1573, %v1576, %v1579
      %v1581 = vsel %vm1571, nan, %v1580
      %v1582 = vand.u32 2147483647, %v1272
      %vm1583 = vcmp.le.f32.partialorder %v1582, 0.7853982
      %vm1584 = vcmp.lt.s32.totalorder %v1272, 0
      %v1585 = vand.u32 %v1272, 2139095040
      %v1586 = vshrl.u32 %v1585, 23
      %v1587 = vsub.s32 %v1586, 127
      %v1588 = vand.u32 2147483647, %v1272
      %v1589 = vand.u32 %v1588, 8388607
      %v1590 = vor.u32 %v1589, 8388608
      %v1591 = vsub.s32 0, %v1590
      %v1592 = vadd.s32 %v1587, 1
      %vm1593 = vcmp.gt.s32.totalorder %v1592, 0
      %v1594 = vsel %vm1593, %v1592, 0
      %v1595 = vshrl.u32 %v1594, 5
      %v1596 = vand.u32 %v1594, 31
      %v1597 = vsub.s32 32, %v1596
      %v1598 = vshrl.u32 683565275, %v1597
      %v1599 = vshll.u32 683565275, %v1596
      %v1600 = vshrl.u32 2475754826, %v1597
      %v1601 = vor.u32 %v1599, %v1600
      %v1602 = vshll.u32 2475754826, %v1596
      %v1603 = vshrl.u32 2131351028, %v1597
      %v1604 = vor.u32 %v1602, %v1603
      %v1605 = vshll.u32 2131351028, %v1596
      %v1606 = vshrl.u32 2102212464, %v1597
      %v1607 = vor.u32 %v1605, %v1606
      %v1608 = vshll.u32 2102212464, %v1596
      %v1609 = vshrl.u32 920167782, %v1597
      %v1610 = vor.u32 %v1608, %v1609
      %v1611 = vshll.u32 920167782, %v1596
      %v1612 = vshrl.u32 1326507024, %v1597
      %v1613 = vor.u32 %v1611, %v1612
      %vm1614 = vcmp.lt.s32.totalorder %v1595, 1
      %vm1615 = vcmp.lt.s32.totalorder %v1595, 2
      %vm1616 = vcmp.lt.s32.totalorder %v1595, 3
      %vm1617 = vcmp.lt.s32.totalorder %v1595, 4
      %v1618 = vsel %vm1614, %v1598, %v1601
      %v1619 = vsel %vm1617, %v1607, 2102212464
      %v1620 = vsel %vm1616, %v1604, %v1619
      %v1621 = vsel %vm1615, %v1618, %v1620
      %v1622 = vsel %vm1614, %v1601, %v1604
      %v1623 = vsel %vm1617, %v1610, 920167782
      %v1624 = vsel %vm1616, %v1607, %v1623
      %v1625 = vsel %vm1615, %v1622, %v1624
      %v1626 = vsel %vm1614, %v1604, %v1607
      %v1627 = vsel %vm1617, %v1613, 1326507024
      %v1628 = vsel %vm1616, %v1610, %v1627
      %v1629 = vsel %vm1615, %v1626, %v1628
      %v1630 = vshll.u32 %v1590, 8
      %v1631 = vand.u32 %v1630, 65535
      %v1632 = vshrl.u32 %v1630, 16
      %v1633 = vand.u32 %v1629, 65535
      %v1634 = vshrl.u32 %v1629, 16
      %v1635 = vmul.u32 %v1631, %v1633
      %v1636 = vmul.u32 %v1631, %v1634
      %v1637 = vmul.u32 %v1632, %v1633
      %v1638 = vmul.u32 %v1632, %v1634
      %v1639 = vshll.u32 %v1636, 16
      %v1640 = vshrl.u32 %v1636, 16
      %v1641 = vshll.u32 %v1637, 16
      %v1642 = vshrl.u32 %v1637, 16
      %vm1643 = vc.u32 %v1635, %v1639
      %v1644 = vsel %vm1643, 1, 0
      %v1645 = vadd.s32 %v1635, %v1639
      %v1646 = vadd.s32 %v1638, %v1644
      %vm1647 = vc.u32 %v1645, %v1641
      %v1648 = vsel %vm1647, 1, 0
      %v1649 = vadd.s32 %v1645, %v1641
      %v1650 = vadd.s32 %v1646, %v1648
      %v1651 = vadd.s32 %v1650, %v1640
      %v1652 = vadd.s32 %v1651, %v1642
      %v1653 = vand.u32 %v1630, 65535
      %v1654 = vshrl.u32 %v1630, 16
      %v1655 = vand.u32 %v1625, 65535
      %v1656 = vshrl.u32 %v1625, 16
      %v1657 = vmul.u32 %v1653, %v1655
      %v1658 = vmul.u32 %v1653, %v1656
      %v1659 = vmul.u32 %v1654, %v1655
      %v1660 = vmul.u32 %v1654, %v1656
      %v1661 = vshll.u32 %v1658, 16
      %v1662 = vshrl.u32 %v1658, 16
      %v1663 = vshll.u32 %v1659, 16
      %v1664 = vshrl.u32 %v1659, 16
      %vm1665 = vc.u32 %v1657, %v1661
      %v1666 = vsel %vm1665, 1, 0
      %v1667 = vadd.s32 %v1657, %v1661
      %v1668 = vadd.s32 %v1660, %v1666
      %vm1669 = vc.u32 %v1667, %v1663
      %v1670 = vsel %vm1669, 1, 0
      %v1671 = vadd.s32 %v1667, %v1663
      %v1672 = vadd.s32 %v1668, %v1670
      %v1673 = vadd.s32 %v1672, %v1662
      %v1674 = vadd.s32 %v1673, %v1664
      %v1675 = vmul.u32 %v1630, %v1621
      %v1676 = vadd.s32 %v1652, %v1671
      %vm1677 = vc.u32 %v1652, %v1671
      %v1678 = vadd.s32 %v1674, 1
      %v1679 = vsel %vm1677, %v1678, %v1674
      %v1680 = vadd.s32 %v1675, %v1679
      %v1681 = vadd.s32 %v1680, 536870912
      %v1682 = vshrl.u32 %v1681, 30
      %v1683 = vshll.u32 %v1682, 30
      %v1684 = vsub.s32 %v1680, %v1683
      %vm1685 = vcmp.lt.s32.totalorder %v1684, 0
      %v1686 = vsub.s32 0, %v1684
      %v1687 = vsel %vm1685, %v1686, %v1684
      %v1688 = vclz %v1687
      %v1689 = vsub.s32 %v1688, 2
      %vm1690 = vcmp.gt.s32.totalorder 0, %v1689
      %v1691 = vsel %vm1690, 0, %v1689
      %v1692 = vsub.s32 32, %v1691
      %v1693 = vshll.u32 %v1684, %v1691
      %v1694 = vshrl.u32 %v1676, %v1692
      %v1695 = vor.u32 %v1693, %v1694
      %v1696 = vsub.s32 4294967266, %v1691
      %v1697 = vadd.s32 %v1696, 127
      %v1698 = vshll.u32 %v1697, 23
      %v1699 = vor.u32 4788187, %v1698
      %v1700 = vand.u32 2147483647, %v1699
      %v1702 = vcvt.s32.f32 %v1695
      %v1703 = vmul.f32 %v1702, %v1700
      %v1704 = vxor.u32 %v1703, 2147483648
      %v1705 = vsel %vm1584, %v1704, %v1703
      %v1706 = vsub.s32 4, %v1682
      %v1707 = vsel %vm1584, %v1706, %v1682
      %v1708 = vsel %vm1583, %v1272, %v1705
      %v1709 = vsel %vm1583, 0, %v1707
      %v1710 = vmul.f32 %v1708, %v1708
      %v1711 = vmul.f32 %v1710, -0.001358992
      %v1712 = vadd.f32 %v1711, 0.041655596
      %v1713 = vmul.f32 %v1710, %v1712
      %v1714 = vadd.f32 %v1713, -0.4999988
      %v1715 = vmul.f32 %v1710, %v1714
      %v1716 = vadd.f32 1.0, %v1715
      %v1717 = vmul.f32 %v1708, %v1708
      %v1718 = vmul.f32 %v1717, -0.00019511016
      %v1719 = vadd.f32 %v1718, 0.008332121
      %v1720 = vmul.f32 %v1717, %v1719
      %v1721 = vadd.f32 %v1720, -0.16666654
      %v1722 = vmul.f32 %v1717, %v1721
      %v1723 = vadd.f32 %v1722, 1.0
      %v1724 = vmul.f32 %v1723, %v1708
      %vm1725 = vweird.f32 %v1272
      %v1726 = vadd.s32 %v1709, 3
      %v1727 = vand.u32 %v1726, 3
      %vm1728 = vcmp.lt.s32.totalorder %v1727, 2
      %vm1729 = vcmp.eq.s32.totalorder %v1727, 0
      %v1730 = vxor.u32 %v1724, 2147483648
      %v1731 = vsel %vm1729, %v1716, %v1730
      %vm1732 = vcmp.eq.s32.totalorder %v1727, 2
      %v1733 = vxor.u32 %v1716, 2147483648
      %v1734 = vsel %vm1732, %v1733, %v1724
      %v1735 = vsel %vm1728, %v1731, %v1734
      %v1736 = vsel %vm1725, nan, %v1735
      %v1737 = vand.u32 2147483647, %v1273
      %vm1738 = vcmp.le.f32.partialorder %v1737, 0.7853982
      %vm1739 = vcmp.lt.s32.totalorder %v1273, 0
      %v1740 = vand.u32 %v1273, 2139095040
      %v1741 = vshrl.u32 %v1740, 23
      %v1742 = vsub.s32 %v1741, 127
      %v1743 = vand.u32 2147483647, %v1273
      %v1744 = vand.u32 %v1743, 8388607
      %v1745 = vor.u32 %v1744, 8388608
      %v1746 = vsub.s32 0, %v1745
      %v1747 = vadd.s32 %v1742, 1
      %vm1748 = vcmp.gt.s32.totalorder %v1747, 0
      %v1749 = vsel %vm1748, %v1747, 0
      %v1750 = vshrl.u32 %v1749, 5
      %v1751 = vand.u32 %v1749, 31
      %v1752 = vsub.s32 32, %v1751
      %v1753 = vshrl.u32 683565275, %v1752
      %v1754 = vshll.u32 683565275, %v1751
      %v1755 = vshrl.u32 2475754826, %v1752
      %v1756 = vor.u32 %v1754, %v1755
      %v1757 = vshll.u32 2475754826, %v1751
      %v1758 = vshrl.u32 2131351028, %v1752
      %v1759 = vor.u32 %v1757, %v1758
      %v1760 = vshll.u32 2131351028, %v1751
      %v1761 = vshrl.u32 2102212464, %v1752
      %v1762 = vor.u32 %v1760, %v1761
      %v1763 = vshll.u32 2102212464, %v1751
      %v1764 = vshrl.u32 920167782, %v1752
      %v1765 = vor.u32 %v1763, %v1764
      %v1766 = vshll.u32 920167782, %v1751
      %v1767 = vshrl.u32 1326507024, %v1752
      %v1768 = vor.u32 %v1766, %v1767
      %vm1769 = vcmp.lt.s32.totalorder %v1750, 1
      %vm1770 = vcmp.lt.s32.totalorder %v1750, 2
      %vm1771 = vcmp.lt.s32.totalorder %v1750, 3
      %vm1772 = vcmp.lt.s32.totalorder %v1750, 4
      %v1773 = vsel %vm1769, %v1753, %v1756
      %v1774 = vsel %vm1772, %v1762, 2102212464
      %v1775 = vsel %vm1771, %v1759, %v1774
      %v1776 = vsel %vm1770, %v1773, %v1775
      %v1777 = vsel %vm1769, %v1756, %v1759
      %v1778 = vsel %vm1772, %v1765, 920167782
      %v1779 = vsel %vm1771, %v1762, %v1778
      %v1780 = vsel %vm1770, %v1777, %v1779
      %v1781 = vsel %vm1769, %v1759, %v1762
      %v1782 = vsel %vm1772, %v1768, 1326507024
      %v1783 = vsel %vm1771, %v1765, %v1782
      %v1784 = vsel %vm1770, %v1781, %v1783
      %v1785 = vshll.u32 %v1745, 8
      %v1786 = vand.u32 %v1785, 65535
      %v1787 = vshrl.u32 %v1785, 16
      %v1788 = vand.u32 %v1784, 65535
      %v1789 = vshrl.u32 %v1784, 16
      %v1790 = vmul.u32 %v1786, %v1788
      %v1791 = vmul.u32 %v1786, %v1789
      %v1792 = vmul.u32 %v1787, %v1788
      %v1793 = vmul.u32 %v1787, %v1789
      %v1794 = vshll.u32 %v1791, 16
      %v1795 = vshrl.u32 %v1791, 16
      %v1796 = vshll.u32 %v1792, 16
      %v1797 = vshrl.u32 %v1792, 16
      %vm1798 = vc.u32 %v1790, %v1794
      %v1799 = vsel %vm1798, 1, 0
      %v1800 = vadd.s32 %v1790, %v1794
      %v1801 = vadd.s32 %v1793, %v1799
      %vm1802 = vc.u32 %v1800, %v1796
      %v1803 = vsel %vm1802, 1, 0
      %v1804 = vadd.s32 %v1800, %v1796
      %v1805 = vadd.s32 %v1801, %v1803
      %v1806 = vadd.s32 %v1805, %v1795
      %v1807 = vadd.s32 %v1806, %v1797
      %v1808 = vand.u32 %v1785, 65535
      %v1809 = vshrl.u32 %v1785, 16
      %v1810 = vand.u32 %v1780, 65535
      %v1811 = vshrl.u32 %v1780, 16
      %v1812 = vmul.u32 %v1808, %v1810
      %v1813 = vmul.u32 %v1808, %v1811
      %v1814 = vmul.u32 %v1809, %v1810
      %v1815 = vmul.u32 %v1809, %v1811
      %v1816 = vshll.u32 %v1813, 16
      %v1817 = vshrl.u32 %v1813, 16
      %v1818 = vshll.u32 %v1814, 16
      %v1819 = vshrl.u32 %v1814, 16
      %vm1820 = vc.u32 %v1812, %v1816
      %v1821 = vsel %vm1820, 1, 0
      %v1822 = vadd.s32 %v1812, %v1816
      %v1823 = vadd.s32 %v1815, %v1821
      %vm1824 = vc.u32 %v1822, %v1818
      %v1825 = vsel %vm1824, 1, 0
      %v1826 = vadd.s32 %v1822, %v1818
      %v1827 = vadd.s32 %v1823, %v1825
      %v1828 = vadd.s32 %v1827, %v1817
      %v1829 = vadd.s32 %v1828, %v1819
      %v1830 = vmul.u32 %v1785, %v1776
      %v1831 = vadd.s32 %v1807, %v1826
      %vm1832 = vc.u32 %v1807, %v1826
      %v1833 = vadd.s32 %v1829, 1
      %v1834 = vsel %vm1832, %v1833, %v1829
      %v1835 = vadd.s32 %v1830, %v1834
      %v1836 = vadd.s32 %v1835, 536870912
      %v1837 = vshrl.u32 %v1836, 30
      %v1838 = vshll.u32 %v1837, 30
      %v1839 = vsub.s32 %v1835, %v1838
      %vm1840 = vcmp.lt.s32.totalorder %v1839, 0
      %v1841 = vsub.s32 0, %v1839
      %v1842 = vsel %vm1840, %v1841, %v1839
      %v1843 = vclz %v1842
      %v1844 = vsub.s32 %v1843, 2
      %vm1845 = vcmp.gt.s32.totalorder 0, %v1844
      %v1846 = vsel %vm1845, 0, %v1844
      %v1847 = vsub.s32 32, %v1846
      %v1848 = vshll.u32 %v1839, %v1846
      %v1849 = vshrl.u32 %v1831, %v1847
      %v1850 = vor.u32 %v1848, %v1849
      %v1851 = vsub.s32 4294967266, %v1846
      %v1852 = vadd.s32 %v1851, 127
      %v1853 = vshll.u32 %v1852, 23
      %v1854 = vor.u32 4788187, %v1853
      %v1855 = vand.u32 2147483647, %v1854
      %v1857 = vcvt.s32.f32 %v1850
      %v1858 = vmul.f32 %v1857, %v1855
      %v1859 = vxor.u32 %v1858, 2147483648
      %v1860 = vsel %vm1739, %v1859, %v1858
      %v1861 = vsub.s32 4, %v1837
      %v1862 = vsel %vm1739, %v1861, %v1837
      %v1863 = vsel %vm1738, %v1273, %v1860
      %v1864 = vsel %vm1738, 0, %v1862
      %v1865 = vmul.f32 %v1863, %v1863
      %v1866 = vmul.f32 %v1865, -0.001358992
      %v1867 = vadd.f32 %v1866, 0.041655596
      %v1868 = vmul.f32 %v1865, %v1867
      %v1869 = vadd.f32 %v1868, -0.4999988
      %v1870 = vmul.f32 %v1865, %v1869
      %v1871 = vadd.f32 1.0, %v1870
      %v1872 = vmul.f32 %v1863, %v1863
      %v1873 = vmul.f32 %v1872, -0.00019511016
      %v1874 = vadd.f32 %v1873, 0.008332121
      %v1875 = vmul.f32 %v1872, %v1874
      %v1876 = vadd.f32 %v1875, -0.16666654
      %v1877 = vmul.f32 %v1872, %v1876
      %v1878 = vadd.f32 %v1877, 1.0
      %v1879 = vmul.f32 %v1878, %v1863
      %vm1880 = vweird.f32 %v1273
      %v1881 = vadd.s32 %v1864, 3
      %v1882 = vand.u32 %v1881, 3
      %vm1883 = vcmp.lt.s32.totalorder %v1882, 2
      %vm1884 = vcmp.eq.s32.totalorder %v1882, 0
      %v1885 = vxor.u32 %v1879, 2147483648
      %v1886 = vsel %vm1884, %v1871, %v1885
      %vm1887 = vcmp.eq.s32.totalorder %v1882, 2
      %v1888 = vxor.u32 %v1871, 2147483648
      %v1889 = vsel %vm1887, %v1888, %v1879
      %v1890 = vsel %vm1883, %v1886, %v1889
      %v1891 = vsel %vm1880, nan, %v1890
      %v1892 = vld [vmem:[%s3] sm:$0xff]
      %v1893 = vld [vmem:[%s3 + $0x8] sm:$0xff]
      %v1894 = vld [vmem:[%s3 + $0x10] sm:$0xff]
      %v1895 = vld [vmem:[%s3 + $0x18] sm:$0xff]
      %v1896 = vld [vmem:[%s5] sm:$0xff]
      %v1897 = vld [vmem:[%s5 + $0x8] sm:$0xff]
      %v1898 = vld [vmem:[%s5 + $0x10] sm:$0xff]
      %v1899 = vld [vmem:[%s5 + $0x18] sm:$0xff]
      %v1901 = vsel %vm1112, %v1896, 0
      %v1904 = vsel %vm1112, %v1897, 0
      %v1907 = vsel %vm1112, %v1898, 0
      %v1910 = vsel %vm1112, %v1899, 0
      %v1913 = vsel %vm1125, %v1736, 0
      %v1916 = vsel %vm1125, %v1891, 0
      %1918 = vmatpush.msra.mxu0 0.0
      %1919 = vmatpush.msra.mxu0 0.0
      %1920 = vmatpush.msra.mxu0 0.0
      %1921 = vmatpush.msra.mxu0 0.0
      %1922 = vmatpush.msra.mxu0 0.0
      %1923 = vmatpush.msra.mxu0 0.0
      %1924 = vmatpush.msra.mxu0 0.0
      %1925 = vmatpush.msra.mxu0 0.0
      %1926 = vmatpush.msra.mxu0 0.0
      %1927 = vmatpush.msra.mxu0 0.0
      %1928 = vmatpush.msra.mxu0 0.0
      %1929 = vmatpush.msra.mxu0 0.0
      %1930 = vmatpush.msra.mxu0 0.0
      %1931 = vmatpush.msra.mxu0 0.0
      %1932 = vmatpush.msra.mxu0 0.0
      %1933 = vmatpush.msra.mxu0 %v1913
      %1934 = vmatmul.f32.gmra.mxu0 %v1901
      %v1935 = vpop.f32.mrf.mxu0
      %v1936 = vadd.f32 0.0, %v1935
      %1937 = vmatmul.f32.gmra.mxu0 %v1904
      %v1938 = vpop.f32.mrf.mxu0
      %v1939 = vadd.f32 0.0, %v1938
      %1940 = vmatmul.f32.gmra.mxu0 %v1907
      %v1941 = vpop.f32.mrf.mxu0
      %v1942 = vadd.f32 0.0, %v1941
      %1943 = vmatmul.f32.gmra.mxu0 %v1910
      %v1944 = vpop.f32.mrf.mxu0
      %v1945 = vadd.f32 0.0, %v1944
      %1946 = vdwg.mxu0
      %1947 = vmatpush.msra.mxu0 0.0
      %1948 = vmatpush.msra.mxu0 0.0
      %1949 = vmatpush.msra.mxu0 0.0
      %1950 = vmatpush.msra.mxu0 0.0
      %1951 = vmatpush.msra.mxu0 0.0
      %1952 = vmatpush.msra.mxu0 0.0
      %1953 = vmatpush.msra.mxu0 0.0
      %1954 = vmatpush.msra.mxu0 0.0
      %1955 = vmatpush.msra.mxu0 0.0
      %1956 = vmatpush.msra.mxu0 0.0
      %1957 = vmatpush.msra.mxu0 0.0
      %1958 = vmatpush.msra.mxu0 0.0
      %1959 = vmatpush.msra.mxu0 0.0
      %1960 = vmatpush.msra.mxu0 0.0
      %1961 = vmatpush.msra.mxu0 0.0
      %1962 = vmatpush.msra.mxu0 %v1916
      %1963 = vmatmul.f32.gmra.mxu0 %v1901
      %v1964 = vpop.f32.mrf.mxu0
      %v1965 = vadd.f32 0.0, %v1964
      %1966 = vmatmul.f32.gmra.mxu0 %v1904
      %v1967 = vpop.f32.mrf.mxu0
      %v1968 = vadd.f32 0.0, %v1967
      %1969 = vmatmul.f32.gmra.mxu0 %v1907
      %v1970 = vpop.f32.mrf.mxu0
      %v1971 = vadd.f32 0.0, %v1970
      %1972 = vmatmul.f32.gmra.mxu0 %v1910
      %v1973 = vpop.f32.mrf.mxu0
      %v1974 = vadd.f32 0.0, %v1973
      %1975 = vdwg.mxu0
      %v1977 = vsel %vm1112, %v1892, 0
      %v1980 = vsel %vm1112, %v1893, 0
      %v1983 = vsel %vm1112, %v1894, 0
      %v1986 = vsel %vm1112, %v1895, 0
      %v1989 = vsel %vm1125, %v1427, 0
      %v1992 = vsel %vm1125, %v1581, 0
      %1994 = vmatpush.msra.mxu0 0.0
      %1995 = vmatpush.msra.mxu0 0.0
      %1996 = vmatpush.msra.mxu0 0.0
      %1997 = vmatpush.msra.mxu0 0.0
      %1998 = vmatpush.msra.mxu0 0.0
      %1999 = vmatpush.msra.mxu0 0.0
      %2000 = vmatpush.msra.mxu0 0.0
      %2001 = vmatpush.msra.mxu0 0.0
      %2002 = vmatpush.msra.mxu0 0.0
      %2003 = vmatpush.msra.mxu0 0.0
      %2004 = vmatpush.msra.mxu0 0.0
      %2005 = vmatpush.msra.mxu0 0.0
      %2006 = vmatpush.msra.mxu0 0.0
      %2007 = vmatpush.msra.mxu0 0.0
      %2008 = vmatpush.msra.mxu0 0.0
      %2009 = vmatpush.msra.mxu0 %v1989
      %2010 = vmatmul.f32.gmra.mxu0 %v1977
      %v2011 = vpop.f32.mrf.mxu0
      %v2012 = vadd.f32 %v1936, %v2011
      %2013 = vmatmul.f32.gmra.mxu0 %v1980
      %v2014 = vpop.f32.mrf.mxu0
      %v2015 = vadd.f32 %v1939, %v2014
      %2016 = vmatmul.f32.gmra.mxu0 %v1983
      %v2017 = vpop.f32.mrf.mxu0
      %v2018 = vadd.f32 %v1942, %v2017
      %2019 = vmatmul.f32.gmra.mxu0 %v1986
      %v2020 = vpop.f32.mrf.mxu0
      %v2021 = vadd.f32 %v1945, %v2020
      %2022 = vdwg.mxu0
      %2023 = vmatpush.msra.mxu0 0.0
      %2024 = vmatpush.msra.mxu0 0.0
      %2025 = vmatpush.msra.mxu0 0.0
      %2026 = vmatpush.msra.mxu0 0.0
      %2027 = vmatpush.msra.mxu0 0.0
      %2028 = vmatpush.msra.mxu0 0.0
      %2029 = vmatpush.msra.mxu0 0.0
      %2030 = vmatpush.msra.mxu0 0.0
      %2031 = vmatpush.msra.mxu0 0.0
      %2032 = vmatpush.msra.mxu0 0.0
      %2033 = vmatpush.msra.mxu0 0.0
      %2034 = vmatpush.msra.mxu0 0.0
      %2035 = vmatpush.msra.mxu0 0.0
      %2036 = vmatpush.msra.mxu0 0.0
      %2037 = vmatpush.msra.mxu0 0.0
      %2038 = vmatpush.msra.mxu0 %v1992
      %2039 = vmatmul.f32.gmra.mxu0 %v1977
      %v2040 = vpop.f32.mrf.mxu0
      %v2041 = vadd.f32 %v1965, %v2040
      %2042 = vmatmul.f32.gmra.mxu0 %v1980
      %v2043 = vpop.f32.mrf.mxu0
      %v2044 = vadd.f32 %v1968, %v2043
      %2045 = vmatmul.f32.gmra.mxu0 %v1983
      %v2046 = vpop.f32.mrf.mxu0
      %v2047 = vadd.f32 %v1971, %v2046
      %2048 = vmatmul.f32.gmra.mxu0 %v1986
      %v2049 = vpop.f32.mrf.mxu0
      %v2050 = vadd.f32 %v1974, %v2049
      %2051 = vdwg.mxu0
      %v2052 = vadd.f32 %v1226, %v2012
      %v2053 = vadd.f32 %v1255, %v2041
      %v2054 = vadd.f32 %v1229, %v2015
      %v2055 = vadd.f32 %v1258, %v2044
      %v2056 = vadd.f32 %v1232, %v2018
      %v2057 = vadd.f32 %v1261, %v2047
      %v2058 = vadd.f32 %v1235, %v2021
      %v2059 = vadd.f32 %v1264, %v2050
      %2061 = vset.pattern.permute.xlu0 0
      %2062 = vperm.xlu0 %2061, %v468
      %v2063 = vpop.permute.xlu0 %2062
      %2066 = vset.pattern.permute.xlu0 0
      %2067 = vperm.xlu0 %2066, %v469
      %v2068 = vpop.permute.xlu0 %2067
      %2071 = vset.pattern.permute.xlu0 0
      %2072 = vperm.xlu0 %2071, %v470
      %v2073 = vpop.permute.xlu0 %2072
      %2076 = vset.pattern.permute.xlu0 0
      %2077 = vperm.xlu0 %2076, %v471
      %v2078 = vpop.permute.xlu0 %2077
      %v2080 = vadd.f32 %v2052, %v2063
      %v2081 = vadd.f32 %v2053, %v2063
      %v2082 = vadd.f32 %v2054, %v2068
      %v2083 = vadd.f32 %v2055, %v2068
      %v2084 = vadd.f32 %v2056, %v2073
      %v2085 = vadd.f32 %v2057, %v2073
      %v2086 = vadd.f32 %v2058, %v2078
      %v2087 = vadd.f32 %v2059, %v2078
      %v2088 = vmax.f32 %v2080, 0.0
      %v2089 = vmax.f32 %v2081, 0.0
      %v2090 = vmax.f32 %v2082, 0.0
      %v2091 = vmax.f32 %v2083, 0.0
      %v2092 = vmax.f32 %v2084, 0.0
      %v2093 = vmax.f32 %v2085, 0.0
      %v2094 = vmax.f32 %v2086, 0.0
      %v2095 = vmax.f32 %v2087, 0.0
      %v2096 = vld [vmem:[%s450] sm:$0xff]
      %v2097 = vld [vmem:[%s450 + $0x8] sm:$0xff]
      %v2098 = vld [vmem:[%s450 + $0x10] sm:$0xff]
      %v2099 = vld [vmem:[%s450 + $0x18] sm:$0xff]
      %v2100 = vld [vmem:[%s455] sm:$0xff]
      %v2101 = vld [vmem:[%s455 + $0x8] sm:$0xff]
      %v2102 = vld [vmem:[%s455 + $0x10] sm:$0xff]
      %v2103 = vld [vmem:[%s455 + $0x18] sm:$0xff]
      %2105 = vset.pattern.permute.xlu0 0
      %2106 = vperm.xlu0 %2105, %v2100
      %v2107 = vpop.permute.xlu0 %2106
      %2110 = vset.pattern.permute.xlu0 0
      %2111 = vperm.xlu0 %2110, %v2101
      %v2112 = vpop.permute.xlu0 %2111
      %2115 = vset.pattern.permute.xlu0 0
      %2116 = vperm.xlu0 %2115, %v2102
      %v2117 = vpop.permute.xlu0 %2116
      %2120 = vset.pattern.permute.xlu0 0
      %2121 = vperm.xlu0 %2120, %v2103
      %v2122 = vpop.permute.xlu0 %2121
      %vm2124 = vcmask 261120
      %v2126 = vsel %vm2124, %v2096, 0
      %v2129 = vsel %vm2124, %v2097, 0
      %v2132 = vsel %vm2124, %v2098, 0
      %v2135 = vsel %vm2124, %v2099, 0
      %2137 = vmatpush.msra.mxu0 0.0
      %2138 = vmatpush.msra.mxu0 0.0
      %2139 = vmatpush.msra.mxu0 0.0
      %2140 = vmatpush.msra.mxu0 0.0
      %2141 = vmatpush.msra.mxu0 0.0
      %2142 = vmatpush.msra.mxu0 0.0
      %2143 = vmatpush.msra.mxu0 0.0
      %2144 = vmatpush.msra.mxu0 0.0
      %2145 = vmatpush.msra.mxu0 0.0
      %2146 = vmatpush.msra.mxu0 0.0
      %2147 = vmatpush.msra.mxu0 0.0
      %2148 = vmatpush.msra.mxu0 0.0
      %2149 = vmatpush.msra.mxu0 %v2094
      %2150 = vmatpush.msra.mxu0 %v2092
      %2151 = vmatpush.msra.mxu0 %v2090
      %2152 = vmatpush.msra.mxu0 %v2088
      %2153 = vmatmul.f32.gmra.mxu0 %v2126
      %v2154 = vpop.f32.mrf.mxu0
      %v2155 = vadd.f32 %v2107, %v2154
      %2156 = vmatmul.f32.gmra.mxu0 %v2129
      %v2157 = vpop.f32.mrf.mxu0
      %v2158 = vadd.f32 %v2112, %v2157
      %2159 = vmatmul.f32.gmra.mxu0 %v2132
      %v2160 = vpop.f32.mrf.mxu0
      %v2161 = vadd.f32 %v2117, %v2160
      %2162 = vmatmul.f32.gmra.mxu0 %v2135
      %v2163 = vpop.f32.mrf.mxu0
      %v2164 = vadd.f32 %v2122, %v2163
      %2165 = vdwg.mxu0
      %2166 = vmatpush.msra.mxu0 0.0
      %2167 = vmatpush.msra.mxu0 0.0
      %2168 = vmatpush.msra.mxu0 0.0
      %2169 = vmatpush.msra.mxu0 0.0
      %2170 = vmatpush.msra.mxu0 0.0
      %2171 = vmatpush.msra.mxu0 0.0
      %2172 = vmatpush.msra.mxu0 0.0
      %2173 = vmatpush.msra.mxu0 0.0
      %2174 = vmatpush.msra.mxu0 0.0
      %2175 = vmatpush.msra.mxu0 0.0
      %2176 = vmatpush.msra.mxu0 0.0
      %2177 = vmatpush.msra.mxu0 0.0
      %2178 = vmatpush.msra.mxu0 %v2095
      %2179 = vmatpush.msra.mxu0 %v2093
      %2180 = vmatpush.msra.mxu0 %v2091
      %2181 = vmatpush.msra.mxu0 %v2089
      %2182 = vmatmul.f32.gmra.mxu0 %v2126
      %v2183 = vpop.f32.mrf.mxu0
      %v2184 = vadd.f32 %v2107, %v2183
      %2185 = vmatmul.f32.gmra.mxu0 %v2129
      %v2186 = vpop.f32.mrf.mxu0
      %v2187 = vadd.f32 %v2112, %v2186
      %2188 = vmatmul.f32.gmra.mxu0 %v2132
      %v2189 = vpop.f32.mrf.mxu0
      %v2190 = vadd.f32 %v2117, %v2189
      %2191 = vmatmul.f32.gmra.mxu0 %v2135
      %v2192 = vpop.f32.mrf.mxu0
      %v2193 = vadd.f32 %v2122, %v2192
      %2194 = vdwg.mxu0
      %v2195 = vmax.f32 %v2155, 0.0
      %v2196 = vmax.f32 %v2184, 0.0
      %v2197 = vmax.f32 %v2158, 0.0
      %v2198 = vmax.f32 %v2187, 0.0
      %v2199 = vmax.f32 %v2161, 0.0
      %v2200 = vmax.f32 %v2190, 0.0
      %v2201 = vmax.f32 %v2164, 0.0
      %v2202 = vmax.f32 %v2193, 0.0
      %v2203 = vld [vmem:[%s9] sm:$0x7]
      %v2204 = vld [vmem:[%s10] sm:$0x7]
      %2206 = vset.pattern.permute.xlu0 0
      %2207 = vperm.xlu0 %2206, %v2204
      %v2208 = vpop.permute.xlu0 %2207
      %v2211 = vsel %vm2124, %v2203, 0
      %2213 = vmatpush.msra.mxu0 0.0
      %2214 = vmatpush.msra.mxu0 0.0
      %2215 = vmatpush.msra.mxu0 0.0
      %2216 = vmatpush.msra.mxu0 0.0
      %2217 = vmatpush.msra.mxu0 0.0
      %2218 = vmatpush.msra.mxu0 0.0
      %2219 = vmatpush.msra.mxu0 0.0
      %2220 = vmatpush.msra.mxu0 0.0
      %2221 = vmatpush.msra.mxu0 0.0
      %2222 = vmatpush.msra.mxu0 0.0
      %2223 = vmatpush.msra.mxu0 0.0
      %2224 = vmatpush.msra.mxu0 0.0
      %2225 = vmatpush.msra.mxu0 %v2201
      %2226 = vmatpush.msra.mxu0 %v2199
      %2227 = vmatpush.msra.mxu0 %v2197
      %2228 = vmatpush.msra.mxu0 %v2195
      %2229 = vmatmul.f32.gmra.mxu0 %v2211
      %v2230 = vpop.f32.mrf.mxu0
      %v2231 = vadd.f32 %v2208, %v2230
      %2232 = vdwg.mxu0
      %2233 = vmatpush.msra.mxu0 0.0
      %2234 = vmatpush.msra.mxu0 0.0
      %2235 = vmatpush.msra.mxu0 0.0
      %2236 = vmatpush.msra.mxu0 0.0
      %2237 = vmatpush.msra.mxu0 0.0
      %2238 = vmatpush.msra.mxu0 0.0
      %2239 = vmatpush.msra.mxu0 0.0
      %2240 = vmatpush.msra.mxu0 0.0
      %2241 = vmatpush.msra.mxu0 0.0
      %2242 = vmatpush.msra.mxu0 0.0
      %2243 = vmatpush.msra.mxu0 0.0
      %2244 = vmatpush.msra.mxu0 0.0
      %2245 = vmatpush.msra.mxu0 %v2202
      %2246 = vmatpush.msra.mxu0 %v2200
      %2247 = vmatpush.msra.mxu0 %v2198
      %2248 = vmatpush.msra.mxu0 %v2196
      %2249 = vmatmul.f32.gmra.mxu0 %v2211
      %v2250 = vpop.f32.mrf.mxu0
      %v2251 = vadd.f32 %v2208, %v2250
      %2252 = vdwg.mxu0
      %v2255 = vrot.slane %v2251, 4
      %v2256 = vsel %vm1125, %v2231, %v2255
      %2258 = vst [vmem:[%s464] sm:$0x77] %v2256
      %s2259 = smul.u32 2, %s27
      %p2260 = scmp.lt.s32.totalorder %s26, 1
      %s2261 = scalar_select %p2260, %s26, 1
      %p2262 = scmp.lt.s32.totalorder %s2259, 1
      %s2263 = scalar_select %p2262, %s2259, 1
      %s2264 = smul.addr %s2261, 2
      %s2265 = sadd.s32 %s2263, %s2264
      %s2266 = smul.addr %s2265, 4
      %s2267 = scalar_lea.vmem %s11, %s2266
      // Predicated region
      $region65: #{tpu_custom_call.1} parent=63 // pred_check
        %p2268 = pneg %p302
      $region66: #{tpu_custom_call.1} parent=63 // pred_check_branch
        %2270 = sbr.rel (%p2268) target = $region68
      $region67: #{tpu_custom_call.1} parent=63 // pred_region
        %s2271 = smul.u32 2, %s27
      $region68: #{tpu_custom_call.1} parent=63 // pred_fallthru
        _
    $region64: #{tpu_custom_call.1} parent=5 // pred_fallthru
      _
    %p2272 = scmp.le.s32.totalorder 2, %s17
    // Predicated region
    $region69: #{tpu_custom_call.1} parent=5 // pred_check
      %p2273 = pneg %p2272
    $region70: #{tpu_custom_call.1} parent=5 // pred_check_branch
      %2275 = sbr.rel (%p2273) target = $region72
    $region71: #{tpu_custom_call.1} parent=5 // pred_region
      %s2276 = ssub.s32 %s17, 2
      // Predicated region
      $region73: #{tpu_custom_call.1} parent=71 // pred_check
        %p2277 = pneg %p308
      $region74: #{tpu_custom_call.1} parent=71 // pred_check_branch
        %2279 = sbr.rel (%p2277) target = $region76
      $region75: #{tpu_custom_call.1} parent=71 // pred_region
        %s2280 = smul.u32 2, %s29
        %p2281 = scmp.lt.s32.totalorder %s28, 1
        %s2282 = scalar_select %p2281, %s28, 1
        %p2283 = scmp.lt.s32.totalorder %s2280, 1
        %s2284 = scalar_select %p2283, %s2280, 1
        %s2285 = smul.addr %s2282, 2
        %s2286 = sadd.s32 %s2284, %s2285
        %s2287 = smul.addr %s2286, 4
        %s2288 = scalar_lea.vmem %s11, %s2287
      $region76: #{tpu_custom_call.1} parent=71 // pred_fallthru
        _
    $region72: #{tpu_custom_call.1} parent=5 // pred_fallthru
      _
  $region6: #{tpu_custom_call.1} parent=0 // loop_footer
    %s21 = sadd.s32 1, %s17
  $region7: #{tpu_custom_call.1} parent=0 // loop_footer_branch
    %16 = sbr.rel target = $region3
  $region8: #{tpu_custom_call.1} parent=0 // loop_exit
    _

</llo_original>
